<compile_context>
chip_gen: v6e
topology: v6e:2x2x1
jax: 0.10.0
libtpu: 0.0.40
codegen_flags: <defaults>
</compile_context>

<pallas_src>
import jax
import jax.numpy as jnp
from jax import lax
from jax.experimental import pallas as pl
from jax.experimental.pallas import tpu as pltpu

SOS_token = 0
EOS_token = 1


def seq2seq_kernel(x_enc_ref, x_dec_ref,
                   w_e_r_ref, w_e_z_ref, w_e_n_ref,
                   b_e_r_ref, b_e_z_ref, b_e_in_ref, b_e_hn_ref,
                   w_d_ir_ref, w_d_iz_ref, w_d_in_ref,
                   b_d_r_ref, b_d_z_ref, b_d_in_ref, b_d_hn_ref,
                   w_d_hr_ref, w_d_hz_ref, w_d_hn_ref,
                   w_out_ref, b_out_ref,
                   out_ref, h_scratch):
    T = out_ref.shape[0]

    def mm(a, w):
        # bf16 x bf16 MXU matmul with f32 accumulation (weights pre-cast at prep).
        return jnp.dot(a.astype(w.dtype), w, preferred_element_type=jnp.float32)

    # ----- encoder: single GRU cell, zero initial hidden  =>  gh == b_hh -----
    x_enc = x_enc_ref[...]
    r_e = jax.nn.sigmoid(mm(x_enc, w_e_r_ref[...]) + b_e_r_ref[...])
    z_e = jax.nn.sigmoid(mm(x_enc, w_e_z_ref[...]) + b_e_z_ref[...])
    n_e = jnp.tanh(mm(x_enc, w_e_n_ref[...]) + b_e_in_ref[...] + r_e * b_e_hn_ref[...])
    h0 = (1.0 - z_e) * n_e                     # + z_e * 0  (h_prev == 0)

    # ----- decoder: constant input -> input-gate matmuls hoisted out of loop -----
    x_dec = x_dec_ref[...]
    gi_r = mm(x_dec, w_d_ir_ref[...]) + b_d_r_ref[...]    # b_ih_r + b_hh_r folded
    gi_z = mm(x_dec, w_d_iz_ref[...]) + b_d_z_ref[...]    # b_ih_z + b_hh_z folded
    gi_n = mm(x_dec, w_d_in_ref[...]) + b_d_in_ref[...]   # b_ih_n only
    b_hn = b_d_hn_ref[...]

    # Hoist per-gate recurrent weights out of the loop (no lane-offset slicing).
    w_hr = w_d_hr_ref[...]
    w_hz = w_d_hz_ref[...]
    w_hn = w_d_hn_ref[...]

    def step(t, h):
        hb = h.astype(w_hr.dtype)
        r = jax.nn.sigmoid(gi_r + jnp.dot(hb, w_hr, preferred_element_type=jnp.float32))
        z = jax.nn.sigmoid(gi_z + jnp.dot(hb, w_hz, preferred_element_type=jnp.float32))
        n = jnp.tanh(gi_n + r * (jnp.dot(hb, w_hn, preferred_element_type=jnp.float32) + b_hn))
        h_new = (1.0 - z) * n + z * h
        h_scratch[pl.ds(t, 1), :] = h_new
        return h_new

    lax.fori_loop(0, T, step, h0, unroll=True)

    # ----- batched output projection + log_softmax, one dense (T, V) store -----
    hs = h_scratch[...]                                     # (T, H)
    logits = mm(hs, w_out_ref[...]) + b_out_ref[...]        # (T, V)
    m = jnp.max(logits, axis=-1, keepdims=True)
    lse = jnp.log(jnp.sum(jnp.exp(logits - m), axis=-1, keepdims=True)) + m
    out_ref[...] = logits - lse                             # log_softmax


def prepare_params(params, weights_dtype=jnp.bfloat16):
    """One-time prep: per-gate split, transpose, bias folding, bf16 weight cast."""
    f32 = jnp.float32
    H = params["w_hh_enc"].shape[1]

    def split_w(w):        # (3H, X) -> three (X, H) input-major blocks
        w = w.astype(f32)
        return (w[0:H].T.astype(weights_dtype),
                w[H:2 * H].T.astype(weights_dtype),
                w[2 * H:3 * H].T.astype(weights_dtype))

    def split_b(b):        # (3H,) -> three (1, H) rows
        b = b.astype(f32)
        return (b[0:H][None, :], b[H:2 * H][None, :], b[2 * H:3 * H][None, :])

    w_e_r, w_e_z, w_e_n = split_w(params["w_ih_enc"])
    bie_r, bie_z, bie_n = split_b(params["b_ih_enc"])
    bhe_r, bhe_z, bhe_n = split_b(params["b_hh_enc"])

    w_d_ir, w_d_iz, w_d_in = split_w(params["w_ih_dec"])
    w_d_hr, w_d_hz, w_d_hn = split_w(params["w_hh_dec"])
    bid_r, bid_z, bid_n = split_b(params["b_ih_dec"])
    bhd_r, bhd_z, bhd_n = split_b(params["b_hh_dec"])

    return {
        "emb_enc": params["emb_enc"].astype(f32),
        # decoder_input is [SOS] and never updated (tutorial bug): constant input.
        "x_dec": jax.nn.relu(params["emb_dec"][SOS_token])[None, :].astype(f32),
        "w_e_r": w_e_r, "w_e_z": w_e_z, "w_e_n": w_e_n,
        "b_e_r": bie_r + bhe_r, "b_e_z": bie_z + bhe_z,
        "b_e_in": bie_n, "b_e_hn": bhe_n,
        "w_d_ir": w_d_ir, "w_d_iz": w_d_iz, "w_d_in": w_d_in,
        "b_d_r": bid_r + bhd_r, "b_d_z": bid_z + bhd_z,
        "b_d_in": bid_n, "b_d_hn": bhd_n,
        "w_d_hr": w_d_hr, "w_d_hz": w_d_hz, "w_d_hn": w_d_hn,
        "w_out_t": params["w_out"].astype(f32).T.astype(weights_dtype),
        "b_out": params["b_out"].astype(f32)[None, :],
    }


def seq2seq_forward(source, target, prepped):
    """source: (input_length,) int32, target: (target_length, batch) int32."""
    T = int(target.shape[0])
    B = int(target.shape[1])
    H = prepped["w_d_hr"].shape[0]
    V = prepped["w_out_t"].shape[1]

    # Only the last source token's encoder call matters (zero hidden every call).
    x_enc = prepped["emb_enc"][source[-1]][None, :]

    args = (
        x_enc, prepped["x_dec"],
        prepped["w_e_r"], prepped["w_e_z"], prepped["w_e_n"],
        prepped["b_e_r"], prepped["b_e_z"], prepped["b_e_in"], prepped["b_e_hn"],
        prepped["w_d_ir"], prepped["w_d_iz"], prepped["w_d_in"],
        prepped["b_d_r"], prepped["b_d_z"], prepped["b_d_in"], prepped["b_d_hn"],
        prepped["w_d_hr"], prepped["w_d_hz"], prepped["w_d_hn"],
        prepped["w_out_t"], prepped["b_out"],
    )

    vmem = pltpu.MemorySpace.VMEM
    out = pl.pallas_call(
        seq2seq_kernel,
        out_shape=jax.ShapeDtypeStruct((T, V), jnp.float32),
        in_specs=[pl.BlockSpec(memory_space=vmem)] * len(args),
        out_specs=pl.BlockSpec(memory_space=vmem),
        scratch_shapes=[pltpu.VMEM((T, H), jnp.float32)],
    )(*args)

    # outputs[t] = decoder_output broadcast across the batch dim.
    return jnp.broadcast_to(out[:, None, :], (T, B, V))


def seq2seq_reference(source, target, prepped):
    """Pure-JAX reference mirroring the kernel math exactly (same dtypes)."""
    f32 = jnp.float32

    def mm(a, w):
        return jnp.dot(a.astype(w.dtype), w, preferred_element_type=f32)

    x_enc = prepped["emb_enc"][source[-1]][None, :]
    r = jax.nn.sigmoid(mm(x_enc, prepped["w_e_r"]) + prepped["b_e_r"])
    z = jax.nn.sigmoid(mm(x_enc, prepped["w_e_z"]) + prepped["b_e_z"])
    n = jnp.tanh(mm(x_enc, prepped["w_e_n"]) + prepped["b_e_in"] + r * prepped["b_e_hn"])
    h = (1.0 - z) * n

    x_dec = prepped["x_dec"]
    gi_r = mm(x_dec, prepped["w_d_ir"]) + prepped["b_d_r"]
    gi_z = mm(x_dec, prepped["w_d_iz"]) + prepped["b_d_z"]
    gi_n = mm(x_dec, prepped["w_d_in"]) + prepped["b_d_in"]

    T, B = int(target.shape[0]), int(target.shape[1])
    hs = []
    for _ in range(T):
        r = jax.nn.sigmoid(gi_r + mm(h, prepped["w_d_hr"]))
        z = jax.nn.sigmoid(gi_z + mm(h, prepped["w_d_hz"]))
        n = jnp.tanh(gi_n + r * (mm(h, prepped["w_d_hn"]) + prepped["b_d_hn"]))
        h = (1.0 - z) * n + z * h
        hs.append(h)
    hs = jnp.concatenate(hs, axis=0)
    logits = mm(hs, prepped["w_out_t"]) + prepped["b_out"]
    logp = jax.nn.log_softmax(logits, axis=-1)
    V = prepped["w_out_t"].shape[1]
    return jnp.broadcast_to(logp[:, None, :], (T, B, V))


def init_params(key, vocab_in, vocab_out, embed_dim, hidden_dim):
    ks = jax.random.split(key, 12)
    s = 1.0 / jnp.sqrt(hidden_dim)
    u = lambda k, shape: jax.random.uniform(k, shape, jnp.float32, -s, s)
    return {
        "emb_enc": jax.random.normal(ks[0], (vocab_in, embed_dim), jnp.float32),
        "emb_dec": jax.random.normal(ks[1], (vocab_out, embed_dim), jnp.float32),
        "w_ih_enc": u(ks[2], (3 * hidden_dim, embed_dim)),
        "w_hh_enc": u(ks[3], (3 * hidden_dim, hidden_dim)),
        "b_ih_enc": u(ks[4], (3 * hidden_dim,)),
        "b_hh_enc": u(ks[5], (3 * hidden_dim,)),
        "w_ih_dec": u(ks[6], (3 * hidden_dim, embed_dim)),
        "w_hh_dec": u(ks[7], (3 * hidden_dim, hidden_dim)),
        "b_ih_dec": u(ks[8], (3 * hidden_dim,)),
        "b_hh_dec": u(ks[9], (3 * hidden_dim,)),
        "w_out": u(ks[10], (vocab_out, hidden_dim)),
        "b_out": u(ks[11], (vocab_out,)),
    }


if __name__ == "__main__":
    key = jax.random.PRNGKey(0)
    k_par, k_src, k_tgt = jax.random.split(key, 3)

    vocab_in, vocab_out = 128, 128       # decoder.output_dim = vocab_size
    embed_dim, hidden_dim = 32, 32
    input_length, target_length, batch = 6, 8, 1

    params = init_params(k_par, vocab_in, vocab_out, embed_dim, hidden_dim)
    prepped = prepare_params(params)     # one-time transposes / splits / bf16 cast

    source = jax.random.randint(k_src, (input_length,), 2, vocab_in, jnp.int32)
    target = jax.random.randint(k_tgt, (target_length, batch), 2, vocab_out, jnp.int32)

    fwd = jax.jit(seq2seq_forward)
    outputs = jax.block_until_ready(fwd(source, target, prepped))
    assert outputs.shape == (target_length, batch, vocab_out)

    ref = jax.block_until_ready(seq2seq_reference(source, target, prepped))
    max_err = float(jnp.max(jnp.abs(outputs - ref)))
    assert max_err < 2e-2, f"max |kernel - ref| = {max_err}"
    print("KERNEL_OK")
</pallas_src>

<mosaic_0001>
module attributes {stable_mosaic.version = 11 : i64} {
  func.func @seq2seq_kernel(%arg0: memref<1x32xf32, #tpu.memory_space<vmem>>, %arg1: memref<1x32xf32, #tpu.memory_space<vmem>>, %arg2: memref<32x32xbf16, #tpu.memory_space<vmem>>, %arg3: memref<32x32xbf16, #tpu.memory_space<vmem>>, %arg4: memref<32x32xbf16, #tpu.memory_space<vmem>>, %arg5: memref<1x32xf32, #tpu.memory_space<vmem>>, %arg6: memref<1x32xf32, #tpu.memory_space<vmem>>, %arg7: memref<1x32xf32, #tpu.memory_space<vmem>>, %arg8: memref<1x32xf32, #tpu.memory_space<vmem>>, %arg9: memref<32x32xbf16, #tpu.memory_space<vmem>>, %arg10: memref<32x32xbf16, #tpu.memory_space<vmem>>, %arg11: memref<32x32xbf16, #tpu.memory_space<vmem>>, %arg12: memref<1x32xf32, #tpu.memory_space<vmem>>, %arg13: memref<1x32xf32, #tpu.memory_space<vmem>>, %arg14: memref<1x32xf32, #tpu.memory_space<vmem>>, %arg15: memref<1x32xf32, #tpu.memory_space<vmem>>, %arg16: memref<32x32xbf16, #tpu.memory_space<vmem>>, %arg17: memref<32x32xbf16, #tpu.memory_space<vmem>>, %arg18: memref<32x32xbf16, #tpu.memory_space<vmem>>, %arg19: memref<32x128xbf16, #tpu.memory_space<vmem>>, %arg20: memref<1x128xf32, #tpu.memory_space<vmem>>, %arg21: memref<8x128xf32, #tpu.memory_space<vmem>>, %arg22: memref<8x32xf32, #tpu.memory_space<vmem>>) attributes {dimension_semantics = [], scalar_prefetch = 0 : i64, scratch_operands = 1 : i64, tpu.core_type = #tpu.core_type<tc>} {
    %c0 = arith.constant 0 : index
    %c0_0 = arith.constant 0 : index
    %0 = vector.load %arg0[%c0, %c0_0] : memref<1x32xf32, #tpu.memory_space<vmem>>, vector<1x32xf32>
    %c0_1 = arith.constant 0 : index
    %c0_2 = arith.constant 0 : index
    %1 = vector.load %arg2[%c0_1, %c0_2] : memref<32x32xbf16, #tpu.memory_space<vmem>>, vector<32x32xbf16>
    %2 = arith.truncf %0 : vector<1x32xf32> to vector<1x32xbf16>
    %cst = arith.constant dense<0.000000e+00> : vector<1x32xf32>
    %3 = tpu.matmul %2, %1, %cst {dimension_numbers = #tpu.dot_dimension_numbers<[1], [0], [0], [1], [0, 0, 1, 1], [], []>} : vector<1x32xbf16>, vector<32x32xbf16>, vector<1x32xf32> -> vector<1x32xf32>
    %c0_3 = arith.constant 0 : index
    %c0_4 = arith.constant 0 : index
    %4 = vector.load %arg5[%c0_3, %c0_4] : memref<1x32xf32, #tpu.memory_space<vmem>>, vector<1x32xf32>
    %5 = arith.addf %3, %4 : vector<1x32xf32>
    %6 = arith.negf %5 : vector<1x32xf32>
    %7 = math.exp %6 : vector<1x32xf32>
    %cst_5 = arith.constant 1.000000e+00 : f32
    %8 = vector.broadcast %cst_5 : f32 to vector<1x32xf32>
    %9 = arith.addf %8, %7 : vector<1x32xf32>
    %10 = arith.divf %8, %9 : vector<1x32xf32>
    %c0_6 = arith.constant 0 : index
    %c0_7 = arith.constant 0 : index
    %11 = vector.load %arg3[%c0_6, %c0_7] : memref<32x32xbf16, #tpu.memory_space<vmem>>, vector<32x32xbf16>
    %12 = arith.truncf %0 : vector<1x32xf32> to vector<1x32xbf16>
    %cst_8 = arith.constant dense<0.000000e+00> : vector<1x32xf32>
    %13 = tpu.matmul %12, %11, %cst_8 {dimension_numbers = #tpu.dot_dimension_numbers<[1], [0], [0], [1], [0, 0, 1, 1], [], []>} : vector<1x32xbf16>, vector<32x32xbf16>, vector<1x32xf32> -> vector<1x32xf32>
    %c0_9 = arith.constant 0 : index
    %c0_10 = arith.constant 0 : index
    %14 = vector.load %arg6[%c0_9, %c0_10] : memref<1x32xf32, #tpu.memory_space<vmem>>, vector<1x32xf32>
    %15 = arith.addf %13, %14 : vector<1x32xf32>
    %16 = arith.negf %15 : vector<1x32xf32>
    %17 = math.exp %16 : vector<1x32xf32>
    %cst_11 = arith.constant 1.000000e+00 : f32
    %18 = vector.broadcast %cst_11 : f32 to vector<1x32xf32>
    %19 = arith.addf %18, %17 : vector<1x32xf32>
    %20 = arith.divf %18, %19 : vector<1x32xf32>
    %c0_12 = arith.constant 0 : index
    %c0_13 = arith.constant 0 : index
    %21 = vector.load %arg4[%c0_12, %c0_13] : memref<32x32xbf16, #tpu.memory_space<vmem>>, vector<32x32xbf16>
    %22 = arith.truncf %0 : vector<1x32xf32> to vector<1x32xbf16>
    %cst_14 = arith.constant dense<0.000000e+00> : vector<1x32xf32>
    %23 = tpu.matmul %22, %21, %cst_14 {dimension_numbers = #tpu.dot_dimension_numbers<[1], [0], [0], [1], [0, 0, 1, 1], [], []>} : vector<1x32xbf16>, vector<32x32xbf16>, vector<1x32xf32> -> vector<1x32xf32>
    %c0_15 = arith.constant 0 : index
    %c0_16 = arith.constant 0 : index
    %24 = vector.load %arg7[%c0_15, %c0_16] : memref<1x32xf32, #tpu.memory_space<vmem>>, vector<1x32xf32>
    %25 = arith.addf %23, %24 : vector<1x32xf32>
    %c0_17 = arith.constant 0 : index
    %c0_18 = arith.constant 0 : index
    %26 = vector.load %arg8[%c0_17, %c0_18] : memref<1x32xf32, #tpu.memory_space<vmem>>, vector<1x32xf32>
    %27 = arith.mulf %10, %26 : vector<1x32xf32>
    %28 = arith.addf %25, %27 : vector<1x32xf32>
    %29 = math.tanh %28 : vector<1x32xf32>
    %cst_19 = arith.constant 1.000000e+00 : f32
    %30 = vector.broadcast %cst_19 : f32 to vector<1x32xf32>
    %31 = arith.subf %30, %20 : vector<1x32xf32>
    %32 = arith.mulf %31, %29 : vector<1x32xf32>
    %c0_20 = arith.constant 0 : index
    %c0_21 = arith.constant 0 : index
    %33 = vector.load %arg1[%c0_20, %c0_21] : memref<1x32xf32, #tpu.memory_space<vmem>>, vector<1x32xf32>
    %c0_22 = arith.constant 0 : index
    %c0_23 = arith.constant 0 : index
    %34 = vector.load %arg9[%c0_22, %c0_23] : memref<32x32xbf16, #tpu.memory_space<vmem>>, vector<32x32xbf16>
    %35 = arith.truncf %33 : vector<1x32xf32> to vector<1x32xbf16>
    %cst_24 = arith.constant dense<0.000000e+00> : vector<1x32xf32>
    %36 = tpu.matmul %35, %34, %cst_24 {dimension_numbers = #tpu.dot_dimension_numbers<[1], [0], [0], [1], [0, 0, 1, 1], [], []>} : vector<1x32xbf16>, vector<32x32xbf16>, vector<1x32xf32> -> vector<1x32xf32>
    %c0_25 = arith.constant 0 : index
    %c0_26 = arith.constant 0 : index
    %37 = vector.load %arg12[%c0_25, %c0_26] : memref<1x32xf32, #tpu.memory_space<vmem>>, vector<1x32xf32>
    %38 = arith.addf %36, %37 : vector<1x32xf32>
    %c0_27 = arith.constant 0 : index
    %c0_28 = arith.constant 0 : index
    %39 = vector.load %arg10[%c0_27, %c0_28] : memref<32x32xbf16, #tpu.memory_space<vmem>>, vector<32x32xbf16>
    %40 = arith.truncf %33 : vector<1x32xf32> to vector<1x32xbf16>
    %cst_29 = arith.constant dense<0.000000e+00> : vector<1x32xf32>
    %41 = tpu.matmul %40, %39, %cst_29 {dimension_numbers = #tpu.dot_dimension_numbers<[1], [0], [0], [1], [0, 0, 1, 1], [], []>} : vector<1x32xbf16>, vector<32x32xbf16>, vector<1x32xf32> -> vector<1x32xf32>
    %c0_30 = arith.constant 0 : index
    %c0_31 = arith.constant 0 : index
    %42 = vector.load %arg13[%c0_30, %c0_31] : memref<1x32xf32, #tpu.memory_space<vmem>>, vector<1x32xf32>
    %43 = arith.addf %41, %42 : vector<1x32xf32>
    %c0_32 = arith.constant 0 : index
    %c0_33 = arith.constant 0 : index
    %44 = vector.load %arg11[%c0_32, %c0_33] : memref<32x32xbf16, #tpu.memory_space<vmem>>, vector<32x32xbf16>
    %45 = arith.truncf %33 : vector<1x32xf32> to vector<1x32xbf16>
    %cst_34 = arith.constant dense<0.000000e+00> : vector<1x32xf32>
    %46 = tpu.matmul %45, %44, %cst_34 {dimension_numbers = #tpu.dot_dimension_numbers<[1], [0], [0], [1], [0, 0, 1, 1], [], []>} : vector<1x32xbf16>, vector<32x32xbf16>, vector<1x32xf32> -> vector<1x32xf32>
    %c0_35 = arith.constant 0 : index
    %c0_36 = arith.constant 0 : index
    %47 = vector.load %arg14[%c0_35, %c0_36] : memref<1x32xf32, #tpu.memory_space<vmem>>, vector<1x32xf32>
    %48 = arith.addf %46, %47 : vector<1x32xf32>
    %c0_37 = arith.constant 0 : index
    %c0_38 = arith.constant 0 : index
    %49 = vector.load %arg15[%c0_37, %c0_38] : memref<1x32xf32, #tpu.memory_space<vmem>>, vector<1x32xf32>
    %c0_39 = arith.constant 0 : index
    %c0_40 = arith.constant 0 : index
    %50 = vector.load %arg16[%c0_39, %c0_40] : memref<32x32xbf16, #tpu.memory_space<vmem>>, vector<32x32xbf16>
    %c0_41 = arith.constant 0 : index
    %c0_42 = arith.constant 0 : index
    %51 = vector.load %arg17[%c0_41, %c0_42] : memref<32x32xbf16, #tpu.memory_space<vmem>>, vector<32x32xbf16>
    %c0_43 = arith.constant 0 : index
    %c0_44 = arith.constant 0 : index
    %52 = vector.load %arg18[%c0_43, %c0_44] : memref<32x32xbf16, #tpu.memory_space<vmem>>, vector<32x32xbf16>
    %c0_i32 = arith.constant 0 : i32
    %53 = arith.truncf %32 : vector<1x32xf32> to vector<1x32xbf16>
    %cst_45 = arith.constant dense<0.000000e+00> : vector<1x32xf32>
    %54 = tpu.matmul %53, %50, %cst_45 {dimension_numbers = #tpu.dot_dimension_numbers<[1], [0], [0], [1], [0, 0, 1, 1], [], []>} : vector<1x32xbf16>, vector<32x32xbf16>, vector<1x32xf32> -> vector<1x32xf32>
    %55 = arith.addf %38, %54 : vector<1x32xf32>
    %56 = arith.negf %55 : vector<1x32xf32>
    %57 = math.exp %56 : vector<1x32xf32>
    %cst_46 = arith.constant 1.000000e+00 : f32
    %58 = vector.broadcast %cst_46 : f32 to vector<1x32xf32>
    %59 = arith.addf %58, %57 : vector<1x32xf32>
    %60 = arith.divf %58, %59 : vector<1x32xf32>
    %cst_47 = arith.constant dense<0.000000e+00> : vector<1x32xf32>
    %61 = tpu.matmul %53, %51, %cst_47 {dimension_numbers = #tpu.dot_dimension_numbers<[1], [0], [0], [1], [0, 0, 1, 1], [], []>} : vector<1x32xbf16>, vector<32x32xbf16>, vector<1x32xf32> -> vector<1x32xf32>
    %62 = arith.addf %43, %61 : vector<1x32xf32>
    %63 = arith.negf %62 : vector<1x32xf32>
    %64 = math.exp %63 : vector<1x32xf32>
    %cst_48 = arith.constant 1.000000e+00 : f32
    %65 = vector.broadcast %cst_48 : f32 to vector<1x32xf32>
    %66 = arith.addf %65, %64 : vector<1x32xf32>
    %67 = arith.divf %65, %66 : vector<1x32xf32>
    %cst_49 = arith.constant dense<0.000000e+00> : vector<1x32xf32>
    %68 = tpu.matmul %53, %52, %cst_49 {dimension_numbers = #tpu.dot_dimension_numbers<[1], [0], [0], [1], [0, 0, 1, 1], [], []>} : vector<1x32xbf16>, vector<32x32xbf16>, vector<1x32xf32> -> vector<1x32xf32>
    %69 = arith.addf %68, %49 : vector<1x32xf32>
    %70 = arith.mulf %60, %69 : vector<1x32xf32>
    %71 = arith.addf %48, %70 : vector<1x32xf32>
    %72 = math.tanh %71 : vector<1x32xf32>
    %cst_50 = arith.constant 1.000000e+00 : f32
    %73 = vector.broadcast %cst_50 : f32 to vector<1x32xf32>
    %74 = arith.subf %73, %67 : vector<1x32xf32>
    %75 = arith.mulf %74, %72 : vector<1x32xf32>
    %76 = arith.mulf %67, %32 : vector<1x32xf32>
    %77 = arith.addf %75, %76 : vector<1x32xf32>
    %78 = arith.index_cast %c0_i32 : i32 to index
    %c0_51 = arith.constant 0 : index
    %79 = vector.load %arg22[%78, %c0_51] : memref<8x32xf32, #tpu.memory_space<vmem>>, vector<1x32xf32>
    tpu.vector_store %arg22[%78, %c0_51], %77 {strides = array<i32>} : memref<8x32xf32, #tpu.memory_space<vmem>>, vector<1x32xf32>,
    %c1_i32 = arith.constant 1 : i32
    %80 = arith.truncf %77 : vector<1x32xf32> to vector<1x32xbf16>
    %cst_52 = arith.constant dense<0.000000e+00> : vector<1x32xf32>
    %81 = tpu.matmul %80, %50, %cst_52 {dimension_numbers = #tpu.dot_dimension_numbers<[1], [0], [0], [1], [0, 0, 1, 1], [], []>} : vector<1x32xbf16>, vector<32x32xbf16>, vector<1x32xf32> -> vector<1x32xf32>
    %82 = arith.addf %38, %81 : vector<1x32xf32>
    %83 = arith.negf %82 : vector<1x32xf32>
    %84 = math.exp %83 : vector<1x32xf32>
    %cst_53 = arith.constant 1.000000e+00 : f32
    %85 = vector.broadcast %cst_53 : f32 to vector<1x32xf32>
    %86 = arith.addf %85, %84 : vector<1x32xf32>
    %87 = arith.divf %85, %86 : vector<1x32xf32>
    %cst_54 = arith.constant dense<0.000000e+00> : vector<1x32xf32>
    %88 = tpu.matmul %80, %51, %cst_54 {dimension_numbers = #tpu.dot_dimension_numbers<[1], [0], [0], [1], [0, 0, 1, 1], [], []>} : vector<1x32xbf16>, vector<32x32xbf16>, vector<1x32xf32> -> vector<1x32xf32>
    %89 = arith.addf %43, %88 : vector<1x32xf32>
    %90 = arith.negf %89 : vector<1x32xf32>
    %91 = math.exp %90 : vector<1x32xf32>
    %cst_55 = arith.constant 1.000000e+00 : f32
    %92 = vector.broadcast %cst_55 : f32 to vector<1x32xf32>
    %93 = arith.addf %92, %91 : vector<1x32xf32>
    %94 = arith.divf %92, %93 : vector<1x32xf32>
    %cst_56 = arith.constant dense<0.000000e+00> : vector<1x32xf32>
    %95 = tpu.matmul %80, %52, %cst_56 {dimension_numbers = #tpu.dot_dimension_numbers<[1], [0], [0], [1], [0, 0, 1, 1], [], []>} : vector<1x32xbf16>, vector<32x32xbf16>, vector<1x32xf32> -> vector<1x32xf32>
    %96 = arith.addf %95, %49 : vector<1x32xf32>
    %97 = arith.mulf %87, %96 : vector<1x32xf32>
    %98 = arith.addf %48, %97 : vector<1x32xf32>
    %99 = math.tanh %98 : vector<1x32xf32>
    %cst_57 = arith.constant 1.000000e+00 : f32
    %100 = vector.broadcast %cst_57 : f32 to vector<1x32xf32>
    %101 = arith.subf %100, %94 : vector<1x32xf32>
    %102 = arith.mulf %101, %99 : vector<1x32xf32>
    %103 = arith.mulf %94, %77 : vector<1x32xf32>
    %104 = arith.addf %102, %103 : vector<1x32xf32>
    %105 = arith.index_cast %c1_i32 : i32 to index
    %c0_58 = arith.constant 0 : index
    %106 = vector.load %arg22[%105, %c0_58] : memref<8x32xf32, #tpu.memory_space<vmem>>, vector<1x32xf32>
    tpu.vector_store %arg22[%105, %c0_58], %104 {strides = array<i32>} : memref<8x32xf32, #tpu.memory_space<vmem>>, vector<1x32xf32>,
    %c2_i32 = arith.constant 2 : i32
    %107 = arith.truncf %104 : vector<1x32xf32> to vector<1x32xbf16>
    %cst_59 = arith.constant dense<0.000000e+00> : vector<1x32xf32>
    %108 = tpu.matmul %107, %50, %cst_59 {dimension_numbers = #tpu.dot_dimension_numbers<[1], [0], [0], [1], [0, 0, 1, 1], [], []>} : vector<1x32xbf16>, vector<32x32xbf16>, vector<1x32xf32> -> vector<1x32xf32>
    %109 = arith.addf %38, %108 : vector<1x32xf32>
    %110 = arith.negf %109 : vector<1x32xf32>
    %111 = math.exp %110 : vector<1x32xf32>
    %cst_60 = arith.constant 1.000000e+00 : f32
    %112 = vector.broadcast %cst_60 : f32 to vector<1x32xf32>
    %113 = arith.addf %112, %111 : vector<1x32xf32>
    %114 = arith.divf %112, %113 : vector<1x32xf32>
    %cst_61 = arith.constant dense<0.000000e+00> : vector<1x32xf32>
    %115 = tpu.matmul %107, %51, %cst_61 {dimension_numbers = #tpu.dot_dimension_numbers<[1], [0], [0], [1], [0, 0, 1, 1], [], []>} : vector<1x32xbf16>, vector<32x32xbf16>, vector<1x32xf32> -> vector<1x32xf32>
    %116 = arith.addf %43, %115 : vector<1x32xf32>
    %117 = arith.negf %116 : vector<1x32xf32>
    %118 = math.exp %117 : vector<1x32xf32>
    %cst_62 = arith.constant 1.000000e+00 : f32
    %119 = vector.broadcast %cst_62 : f32 to vector<1x32xf32>
    %120 = arith.addf %119, %118 : vector<1x32xf32>
    %121 = arith.divf %119, %120 : vector<1x32xf32>
    %cst_63 = arith.constant dense<0.000000e+00> : vector<1x32xf32>
    %122 = tpu.matmul %107, %52, %cst_63 {dimension_numbers = #tpu.dot_dimension_numbers<[1], [0], [0], [1], [0, 0, 1, 1], [], []>} : vector<1x32xbf16>, vector<32x32xbf16>, vector<1x32xf32> -> vector<1x32xf32>
    %123 = arith.addf %122, %49 : vector<1x32xf32>
    %124 = arith.mulf %114, %123 : vector<1x32xf32>
    %125 = arith.addf %48, %124 : vector<1x32xf32>
    %126 = math.tanh %125 : vector<1x32xf32>
    %cst_64 = arith.constant 1.000000e+00 : f32
    %127 = vector.broadcast %cst_64 : f32 to vector<1x32xf32>
    %128 = arith.subf %127, %121 : vector<1x32xf32>
    %129 = arith.mulf %128, %126 : vector<1x32xf32>
    %130 = arith.mulf %121, %104 : vector<1x32xf32>
    %131 = arith.addf %129, %130 : vector<1x32xf32>
    %132 = arith.index_cast %c2_i32 : i32 to index
    %c0_65 = arith.constant 0 : index
    %133 = vector.load %arg22[%132, %c0_65] : memref<8x32xf32, #tpu.memory_space<vmem>>, vector<1x32xf32>
    tpu.vector_store %arg22[%132, %c0_65], %131 {strides = array<i32>} : memref<8x32xf32, #tpu.memory_space<vmem>>, vector<1x32xf32>,
    %c3_i32 = arith.constant 3 : i32
    %134 = arith.truncf %131 : vector<1x32xf32> to vector<1x32xbf16>
    %cst_66 = arith.constant dense<0.000000e+00> : vector<1x32xf32>
    %135 = tpu.matmul %134, %50, %cst_66 {dimension_numbers = #tpu.dot_dimension_numbers<[1], [0], [0], [1], [0, 0, 1, 1], [], []>} : vector<1x32xbf16>, vector<32x32xbf16>, vector<1x32xf32> -> vector<1x32xf32>
    %136 = arith.addf %38, %135 : vector<1x32xf32>
    %137 = arith.negf %136 : vector<1x32xf32>
    %138 = math.exp %137 : vector<1x32xf32>
    %cst_67 = arith.constant 1.000000e+00 : f32
    %139 = vector.broadcast %cst_67 : f32 to vector<1x32xf32>
    %140 = arith.addf %139, %138 : vector<1x32xf32>
    %141 = arith.divf %139, %140 : vector<1x32xf32>
    %cst_68 = arith.constant dense<0.000000e+00> : vector<1x32xf32>
    %142 = tpu.matmul %134, %51, %cst_68 {dimension_numbers = #tpu.dot_dimension_numbers<[1], [0], [0], [1], [0, 0, 1, 1], [], []>} : vector<1x32xbf16>, vector<32x32xbf16>, vector<1x32xf32> -> vector<1x32xf32>
    %143 = arith.addf %43, %142 : vector<1x32xf32>
    %144 = arith.negf %143 : vector<1x32xf32>
    %145 = math.exp %144 : vector<1x32xf32>
    %cst_69 = arith.constant 1.000000e+00 : f32
    %146 = vector.broadcast %cst_69 : f32 to vector<1x32xf32>
    %147 = arith.addf %146, %145 : vector<1x32xf32>
    %148 = arith.divf %146, %147 : vector<1x32xf32>
    %cst_70 = arith.constant dense<0.000000e+00> : vector<1x32xf32>
    %149 = tpu.matmul %134, %52, %cst_70 {dimension_numbers = #tpu.dot_dimension_numbers<[1], [0], [0], [1], [0, 0, 1, 1], [], []>} : vector<1x32xbf16>, vector<32x32xbf16>, vector<1x32xf32> -> vector<1x32xf32>
    %150 = arith.addf %149, %49 : vector<1x32xf32>
    %151 = arith.mulf %141, %150 : vector<1x32xf32>
    %152 = arith.addf %48, %151 : vector<1x32xf32>
    %153 = math.tanh %152 : vector<1x32xf32>
    %cst_71 = arith.constant 1.000000e+00 : f32
    %154 = vector.broadcast %cst_71 : f32 to vector<1x32xf32>
    %155 = arith.subf %154, %148 : vector<1x32xf32>
    %156 = arith.mulf %155, %153 : vector<1x32xf32>
    %157 = arith.mulf %148, %131 : vector<1x32xf32>
    %158 = arith.addf %156, %157 : vector<1x32xf32>
    %159 = arith.index_cast %c3_i32 : i32 to index
    %c0_72 = arith.constant 0 : index
    %160 = vector.load %arg22[%159, %c0_72] : memref<8x32xf32, #tpu.memory_space<vmem>>, vector<1x32xf32>
    tpu.vector_store %arg22[%159, %c0_72], %158 {strides = array<i32>} : memref<8x32xf32, #tpu.memory_space<vmem>>, vector<1x32xf32>,
    %c4_i32 = arith.constant 4 : i32
    %161 = arith.truncf %158 : vector<1x32xf32> to vector<1x32xbf16>
    %cst_73 = arith.constant dense<0.000000e+00> : vector<1x32xf32>
    %162 = tpu.matmul %161, %50, %cst_73 {dimension_numbers = #tpu.dot_dimension_numbers<[1], [0], [0], [1], [0, 0, 1, 1], [], []>} : vector<1x32xbf16>, vector<32x32xbf16>, vector<1x32xf32> -> vector<1x32xf32>
    %163 = arith.addf %38, %162 : vector<1x32xf32>
    %164 = arith.negf %163 : vector<1x32xf32>
    %165 = math.exp %164 : vector<1x32xf32>
    %cst_74 = arith.constant 1.000000e+00 : f32
    %166 = vector.broadcast %cst_74 : f32 to vector<1x32xf32>
    %167 = arith.addf %166, %165 : vector<1x32xf32>
    %168 = arith.divf %166, %167 : vector<1x32xf32>
    %cst_75 = arith.constant dense<0.000000e+00> : vector<1x32xf32>
    %169 = tpu.matmul %161, %51, %cst_75 {dimension_numbers = #tpu.dot_dimension_numbers<[1], [0], [0], [1], [0, 0, 1, 1], [], []>} : vector<1x32xbf16>, vector<32x32xbf16>, vector<1x32xf32> -> vector<1x32xf32>
    %170 = arith.addf %43, %169 : vector<1x32xf32>
    %171 = arith.negf %170 : vector<1x32xf32>
    %172 = math.exp %171 : vector<1x32xf32>
    %cst_76 = arith.constant 1.000000e+00 : f32
    %173 = vector.broadcast %cst_76 : f32 to vector<1x32xf32>
    %174 = arith.addf %173, %172 : vector<1x32xf32>
    %175 = arith.divf %173, %174 : vector<1x32xf32>
    %cst_77 = arith.constant dense<0.000000e+00> : vector<1x32xf32>
    %176 = tpu.matmul %161, %52, %cst_77 {dimension_numbers = #tpu.dot_dimension_numbers<[1], [0], [0], [1], [0, 0, 1, 1], [], []>} : vector<1x32xbf16>, vector<32x32xbf16>, vector<1x32xf32> -> vector<1x32xf32>
    %177 = arith.addf %176, %49 : vector<1x32xf32>
    %178 = arith.mulf %168, %177 : vector<1x32xf32>
    %179 = arith.addf %48, %178 : vector<1x32xf32>
    %180 = math.tanh %179 : vector<1x32xf32>
    %cst_78 = arith.constant 1.000000e+00 : f32
    %181 = vector.broadcast %cst_78 : f32 to vector<1x32xf32>
    %182 = arith.subf %181, %175 : vector<1x32xf32>
    %183 = arith.mulf %182, %180 : vector<1x32xf32>
    %184 = arith.mulf %175, %158 : vector<1x32xf32>
    %185 = arith.addf %183, %184 : vector<1x32xf32>
    %186 = arith.index_cast %c4_i32 : i32 to index
    %c0_79 = arith.constant 0 : index
    %187 = vector.load %arg22[%186, %c0_79] : memref<8x32xf32, #tpu.memory_space<vmem>>, vector<1x32xf32>
    tpu.vector_store %arg22[%186, %c0_79], %185 {strides = array<i32>} : memref<8x32xf32, #tpu.memory_space<vmem>>, vector<1x32xf32>,
    %c5_i32 = arith.constant 5 : i32
    %188 = arith.truncf %185 : vector<1x32xf32> to vector<1x32xbf16>
    %cst_80 = arith.constant dense<0.000000e+00> : vector<1x32xf32>
    %189 = tpu.matmul %188, %50, %cst_80 {dimension_numbers = #tpu.dot_dimension_numbers<[1], [0], [0], [1], [0, 0, 1, 1], [], []>} : vector<1x32xbf16>, vector<32x32xbf16>, vector<1x32xf32> -> vector<1x32xf32>
    %190 = arith.addf %38, %189 : vector<1x32xf32>
    %191 = arith.negf %190 : vector<1x32xf32>
    %192 = math.exp %191 : vector<1x32xf32>
    %cst_81 = arith.constant 1.000000e+00 : f32
    %193 = vector.broadcast %cst_81 : f32 to vector<1x32xf32>
    %194 = arith.addf %193, %192 : vector<1x32xf32>
    %195 = arith.divf %193, %194 : vector<1x32xf32>
    %cst_82 = arith.constant dense<0.000000e+00> : vector<1x32xf32>
    %196 = tpu.matmul %188, %51, %cst_82 {dimension_numbers = #tpu.dot_dimension_numbers<[1], [0], [0], [1], [0, 0, 1, 1], [], []>} : vector<1x32xbf16>, vector<32x32xbf16>, vector<1x32xf32> -> vector<1x32xf32>
    %197 = arith.addf %43, %196 : vector<1x32xf32>
    %198 = arith.negf %197 : vector<1x32xf32>
    %199 = math.exp %198 : vector<1x32xf32>
    %cst_83 = arith.constant 1.000000e+00 : f32
    %200 = vector.broadcast %cst_83 : f32 to vector<1x32xf32>
    %201 = arith.addf %200, %199 : vector<1x32xf32>
    %202 = arith.divf %200, %201 : vector<1x32xf32>
    %cst_84 = arith.constant dense<0.000000e+00> : vector<1x32xf32>
    %203 = tpu.matmul %188, %52, %cst_84 {dimension_numbers = #tpu.dot_dimension_numbers<[1], [0], [0], [1], [0, 0, 1, 1], [], []>} : vector<1x32xbf16>, vector<32x32xbf16>, vector<1x32xf32> -> vector<1x32xf32>
    %204 = arith.addf %203, %49 : vector<1x32xf32>
    %205 = arith.mulf %195, %204 : vector<1x32xf32>
    %206 = arith.addf %48, %205 : vector<1x32xf32>
    %207 = math.tanh %206 : vector<1x32xf32>
    %cst_85 = arith.constant 1.000000e+00 : f32
    %208 = vector.broadcast %cst_85 : f32 to vector<1x32xf32>
    %209 = arith.subf %208, %202 : vector<1x32xf32>
    %210 = arith.mulf %209, %207 : vector<1x32xf32>
    %211 = arith.mulf %202, %185 : vector<1x32xf32>
    %212 = arith.addf %210, %211 : vector<1x32xf32>
    %213 = arith.index_cast %c5_i32 : i32 to index
    %c0_86 = arith.constant 0 : index
    %214 = vector.load %arg22[%213, %c0_86] : memref<8x32xf32, #tpu.memory_space<vmem>>, vector<1x32xf32>
    tpu.vector_store %arg22[%213, %c0_86], %212 {strides = array<i32>} : memref<8x32xf32, #tpu.memory_space<vmem>>, vector<1x32xf32>,
    %c6_i32 = arith.constant 6 : i32
    %215 = arith.truncf %212 : vector<1x32xf32> to vector<1x32xbf16>
    %cst_87 = arith.constant dense<0.000000e+00> : vector<1x32xf32>
    %216 = tpu.matmul %215, %50, %cst_87 {dimension_numbers = #tpu.dot_dimension_numbers<[1], [0], [0], [1], [0, 0, 1, 1], [], []>} : vector<1x32xbf16>, vector<32x32xbf16>, vector<1x32xf32> -> vector<1x32xf32>
    %217 = arith.addf %38, %216 : vector<1x32xf32>
    %218 = arith.negf %217 : vector<1x32xf32>
    %219 = math.exp %218 : vector<1x32xf32>
    %cst_88 = arith.constant 1.000000e+00 : f32
    %220 = vector.broadcast %cst_88 : f32 to vector<1x32xf32>
    %221 = arith.addf %220, %219 : vector<1x32xf32>
    %222 = arith.divf %220, %221 : vector<1x32xf32>
    %cst_89 = arith.constant dense<0.000000e+00> : vector<1x32xf32>
    %223 = tpu.matmul %215, %51, %cst_89 {dimension_numbers = #tpu.dot_dimension_numbers<[1], [0], [0], [1], [0, 0, 1, 1], [], []>} : vector<1x32xbf16>, vector<32x32xbf16>, vector<1x32xf32> -> vector<1x32xf32>
    %224 = arith.addf %43, %223 : vector<1x32xf32>
    %225 = arith.negf %224 : vector<1x32xf32>
    %226 = math.exp %225 : vector<1x32xf32>
    %cst_90 = arith.constant 1.000000e+00 : f32
    %227 = vector.broadcast %cst_90 : f32 to vector<1x32xf32>
    %228 = arith.addf %227, %226 : vector<1x32xf32>
    %229 = arith.divf %227, %228 : vector<1x32xf32>
    %cst_91 = arith.constant dense<0.000000e+00> : vector<1x32xf32>
    %230 = tpu.matmul %215, %52, %cst_91 {dimension_numbers = #tpu.dot_dimension_numbers<[1], [0], [0], [1], [0, 0, 1, 1], [], []>} : vector<1x32xbf16>, vector<32x32xbf16>, vector<1x32xf32> -> vector<1x32xf32>
    %231 = arith.addf %230, %49 : vector<1x32xf32>
    %232 = arith.mulf %222, %231 : vector<1x32xf32>
    %233 = arith.addf %48, %232 : vector<1x32xf32>
    %234 = math.tanh %233 : vector<1x32xf32>
    %cst_92 = arith.constant 1.000000e+00 : f32
    %235 = vector.broadcast %cst_92 : f32 to vector<1x32xf32>
    %236 = arith.subf %235, %229 : vector<1x32xf32>
    %237 = arith.mulf %236, %234 : vector<1x32xf32>
    %238 = arith.mulf %229, %212 : vector<1x32xf32>
    %239 = arith.addf %237, %238 : vector<1x32xf32>
    %240 = arith.index_cast %c6_i32 : i32 to index
    %c0_93 = arith.constant 0 : index
    %241 = vector.load %arg22[%240, %c0_93] : memref<8x32xf32, #tpu.memory_space<vmem>>, vector<1x32xf32>
    tpu.vector_store %arg22[%240, %c0_93], %239 {strides = array<i32>} : memref<8x32xf32, #tpu.memory_space<vmem>>, vector<1x32xf32>,
    %c7_i32 = arith.constant 7 : i32
    %242 = arith.truncf %239 : vector<1x32xf32> to vector<1x32xbf16>
    %cst_94 = arith.constant dense<0.000000e+00> : vector<1x32xf32>
    %243 = tpu.matmul %242, %50, %cst_94 {dimension_numbers = #tpu.dot_dimension_numbers<[1], [0], [0], [1], [0, 0, 1, 1], [], []>} : vector<1x32xbf16>, vector<32x32xbf16>, vector<1x32xf32> -> vector<1x32xf32>
    %244 = arith.addf %38, %243 : vector<1x32xf32>
    %245 = arith.negf %244 : vector<1x32xf32>
    %246 = math.exp %245 : vector<1x32xf32>
    %cst_95 = arith.constant 1.000000e+00 : f32
    %247 = vector.broadcast %cst_95 : f32 to vector<1x32xf32>
    %248 = arith.addf %247, %246 : vector<1x32xf32>
    %249 = arith.divf %247, %248 : vector<1x32xf32>
    %cst_96 = arith.constant dense<0.000000e+00> : vector<1x32xf32>
    %250 = tpu.matmul %242, %51, %cst_96 {dimension_numbers = #tpu.dot_dimension_numbers<[1], [0], [0], [1], [0, 0, 1, 1], [], []>} : vector<1x32xbf16>, vector<32x32xbf16>, vector<1x32xf32> -> vector<1x32xf32>
    %251 = arith.addf %43, %250 : vector<1x32xf32>
    %252 = arith.negf %251 : vector<1x32xf32>
    %253 = math.exp %252 : vector<1x32xf32>
    %cst_97 = arith.constant 1.000000e+00 : f32
    %254 = vector.broadcast %cst_97 : f32 to vector<1x32xf32>
    %255 = arith.addf %254, %253 : vector<1x32xf32>
    %256 = arith.divf %254, %255 : vector<1x32xf32>
    %cst_98 = arith.constant dense<0.000000e+00> : vector<1x32xf32>
    %257 = tpu.matmul %242, %52, %cst_98 {dimension_numbers = #tpu.dot_dimension_numbers<[1], [0], [0], [1], [0, 0, 1, 1], [], []>} : vector<1x32xbf16>, vector<32x32xbf16>, vector<1x32xf32> -> vector<1x32xf32>
    %258 = arith.addf %257, %49 : vector<1x32xf32>
    %259 = arith.mulf %249, %258 : vector<1x32xf32>
    %260 = arith.addf %48, %259 : vector<1x32xf32>
    %261 = math.tanh %260 : vector<1x32xf32>
    %cst_99 = arith.constant 1.000000e+00 : f32
    %262 = vector.broadcast %cst_99 : f32 to vector<1x32xf32>
    %263 = arith.subf %262, %256 : vector<1x32xf32>
    %264 = arith.mulf %263, %261 : vector<1x32xf32>
    %265 = arith.mulf %256, %239 : vector<1x32xf32>
    %266 = arith.addf %264, %265 : vector<1x32xf32>
    %267 = arith.index_cast %c7_i32 : i32 to index
    %c0_100 = arith.constant 0 : index
    %268 = vector.load %arg22[%267, %c0_100] : memref<8x32xf32, #tpu.memory_space<vmem>>, vector<1x32xf32>
    tpu.vector_store %arg22[%267, %c0_100], %266 {strides = array<i32>} : memref<8x32xf32, #tpu.memory_space<vmem>>, vector<1x32xf32>,
    %c8_i32 = arith.constant 8 : i32
    %c0_101 = arith.constant 0 : index
    %c0_102 = arith.constant 0 : index
    %269 = vector.load %arg22[%c0_101, %c0_102] : memref<8x32xf32, #tpu.memory_space<vmem>>, vector<8x32xf32>
    %c0_103 = arith.constant 0 : index
    %c0_104 = arith.constant 0 : index
    %270 = vector.load %arg19[%c0_103, %c0_104] : memref<32x128xbf16, #tpu.memory_space<vmem>>, vector<32x128xbf16>
    %271 = arith.truncf %269 : vector<8x32xf32> to vector<8x32xbf16>
    %cst_105 = arith.constant dense<0.000000e+00> : vector<8x128xf32>
    %272 = tpu.matmul %271, %270, %cst_105 {dimension_numbers = #tpu.dot_dimension_numbers<[1], [0], [0], [1], [0, 0, 1, 1], [], []>} : vector<8x32xbf16>, vector<32x128xbf16>, vector<8x128xf32> -> vector<8x128xf32>
    %c0_106 = arith.constant 0 : index
    %c0_107 = arith.constant 0 : index
    %273 = vector.load %arg20[%c0_106, %c0_107] : memref<1x128xf32, #tpu.memory_space<vmem>>, vector<1x128xf32>
    %274 = vector.broadcast %273 : vector<1x128xf32> to vector<8x128xf32>
    %275 = arith.addf %272, %274 : vector<8x128xf32>
    %cst_108 = arith.constant dense<0xFF800000> : vector<8xf32>
    %276 = vector.multi_reduction <maximumf>, %275, %cst_108 [1] : vector<8x128xf32> to vector<8xf32>
    %277 = vector.shape_cast %276 : vector<8xf32> to vector<8x1xf32>
    %278 = vector.broadcast %277 : vector<8x1xf32> to vector<8x128xf32>
    %279 = arith.subf %275, %278 : vector<8x128xf32>
    %280 = math.exp %279 : vector<8x128xf32>
    %cst_109 = arith.constant dense<0.000000e+00> : vector<8xf32>
    %281 = vector.multi_reduction <add>, %280, %cst_109 [1] : vector<8x128xf32> to vector<8xf32>
    %282 = vector.shape_cast %281 : vector<8xf32> to vector<8x1xf32>
    %283 = math.log %282 : vector<8x1xf32>
    %284 = arith.addf %283, %277 : vector<8x1xf32>
    %285 = vector.broadcast %284 : vector<8x1xf32> to vector<8x128xf32>
    %286 = arith.subf %275, %285 : vector<8x128xf32>
    %c0_110 = arith.constant 0 : index
    %c0_111 = arith.constant 0 : index
    %287 = vector.load %arg21[%c0_110, %c0_111] : memref<8x128xf32, #tpu.memory_space<vmem>>, vector<8x128xf32>
    tpu.vector_store %arg21[%c0_110, %c0_111], %286 {strides = array<i32>} : memref<8x128xf32, #tpu.memory_space<vmem>>, vector<8x128xf32>,
    return
  }
}

</mosaic_0001>

<llo_original>
// kernel: seq2seq_forward.1
$region0: #{seq2seq_forward.1}
  #allocation0 [shape = 'u32[]', space=smem, size = 0x4, offset = 0x4, fixed_abs, tag = 'smem constant byte address 0x4 - core index']
  #allocation1 [shape = 'u32[144,128]{1,0:T(1,128)}', space=vmem, size = 0x12000, scoped, tag = 'internal scratch']
  #allocation2 [shape = 'f32[8,32]{1,0:T(8,128)}', space=vmem, size = 0x1000, scoped, tag = 'scratch operand']
  %s0 = inlined_call_operand.vmem [shape: f32[1,32], index: 0, kind: input, shape index: {}]
  %s1 = inlined_call_operand.vmem [shape: f32[1,32], index: 1, kind: input, shape index: {}]
  %s2 = inlined_call_operand.vmem [shape: bf16[32,32], index: 2, kind: input, shape index: {}]
  %s3 = inlined_call_operand.vmem [shape: bf16[32,32], index: 3, kind: input, shape index: {}]
  %s4 = inlined_call_operand.vmem [shape: bf16[32,32], index: 4, kind: input, shape index: {}]
  %s5 = inlined_call_operand.hbm [shape: f32[1,32], index: 5, kind: input, shape index: {}]
  %s6 = inlined_call_operand.hbm [shape: f32[1,32], index: 6, kind: input, shape index: {}]
  %s7 = inlined_call_operand.hbm [shape: f32[1,32], index: 7, kind: input, shape index: {}]
  %s8 = inlined_call_operand.hbm [shape: f32[1,32], index: 8, kind: input, shape index: {}]
  %s9 = inlined_call_operand.vmem [shape: bf16[32,32], index: 9, kind: input, shape index: {}]
  %s10 = inlined_call_operand.vmem [shape: bf16[32,32], index: 10, kind: input, shape index: {}]
  %s11 = inlined_call_operand.vmem [shape: bf16[32,32], index: 11, kind: input, shape index: {}]
  %s12 = inlined_call_operand.hbm [shape: f32[1,32], index: 12, kind: input, shape index: {}]
  %s13 = inlined_call_operand.hbm [shape: f32[1,32], index: 13, kind: input, shape index: {}]
  %s14 = inlined_call_operand.hbm [shape: f32[1,32], index: 14, kind: input, shape index: {}]
  %s15 = inlined_call_operand.hbm [shape: f32[1,32], index: 15, kind: input, shape index: {}]
  %s16 = inlined_call_operand.vmem [shape: bf16[32,32], index: 16, kind: input, shape index: {}]
  %s17 = inlined_call_operand.vmem [shape: bf16[32,32], index: 17, kind: input, shape index: {}]
  %s18 = inlined_call_operand.hbm [shape: bf16[32,32], index: 18, kind: input, shape index: {}]
  %s19 = inlined_call_operand.vmem [shape: bf16[32,128], index: 19, kind: input, shape index: {}]
  %s20 = inlined_call_operand.hbm [shape: f32[1,128], index: 20, kind: input, shape index: {}]
  %s21 = inlined_call_operand.hbm [shape: f32[8,128], index: 21, kind: output, shape index: {}]
  %s22 = sld [smem:[#allocation0]]
  $region134: #{seq2seq_forward.1} parent=0
    _
  %s24 = ssub.s32 1, %s22
  %s25 = scalar_select 0, %s24, %s22
  $region1: #{seq2seq_forward.1} parent=0
    #allocation3 [shape = 'u8[512]{0}', space=vmem, size = 0x400, scoped, tag = 'input window, operand 5, single buffered']
    #allocation4 [shape = 's32[1]{0}', space=sflag, size = 0x4, scoped, tag = 'scoped memory for seq2seq_forward.1']
    #allocation5 [shape = 's32[1]{0}', space=sflag, size = 0x4, scoped, tag = 'scoped memory for seq2seq_forward.1']
    #allocation6 [shape = 'u8[512]{0}', space=vmem, size = 0x400, scoped, tag = 'input window, operand 6, single buffered']
    #allocation7 [shape = 's32[1]{0}', space=sflag, size = 0x4, scoped, tag = 'scoped memory for seq2seq_forward.1']
    #allocation8 [shape = 'u8[512]{0}', space=vmem, size = 0x400, scoped, tag = 'input window, operand 7, single buffered']
    #allocation9 [shape = 'u8[512]{0}', space=vmem, size = 0x400, scoped, tag = 'input window, operand 8, single buffered']
    #allocation10 [shape = 's32[1]{0}', space=sflag, size = 0x4, scoped, tag = 'scoped memory for seq2seq_forward.1']
    #allocation11 [shape = 'u8[512]{0}', space=vmem, size = 0x400, scoped, tag = 'input window, operand 12, single buffered']
    #allocation12 [shape = 'u8[512]{0}', space=vmem, size = 0x400, scoped, tag = 'input window, operand 13, single buffered']
    #allocation13 [shape = 's32[1]{0}', space=sflag, size = 0x4, scoped, tag = 'scoped memory for seq2seq_forward.1']
    #allocation14 [shape = 'u8[512]{0}', space=vmem, size = 0x400, scoped, tag = 'input window, operand 14, single buffered']
    #allocation15 [shape = 'u8[512]{0}', space=vmem, size = 0x400, scoped, tag = 'input window, operand 15, single buffered']
    #allocation16 [shape = 's32[1]{0}', space=sflag, size = 0x4, scoped, tag = 'scoped memory for seq2seq_forward.1']
    #allocation17 [shape = 'u8[8192]{0}', space=vmem, size = 0x2000, scoped, tag = 'input window, operand 18, single buffered']
    #allocation18 [shape = 'u8[512]{0}', space=vmem, size = 0x400, scoped, tag = 'input window, operand 20, single buffered']
    #allocation19 [shape = 's32[1]{0}', space=sflag, size = 0x4, scoped, tag = 'scoped memory for seq2seq_forward.1']
    #allocation20 [shape = 'u8[4096]{0}', space=vmem, size = 0x1000, scoped, tag = 'output window, operand 0, single buffered']
    %26 = vsyncpa [#allocation4], 0
    %27 = vsyncpa [#allocation7], 0
    %28 = vsyncpa [#allocation10], 0
    %29 = vsyncpa [#allocation13], 0
    %30 = vsyncpa [#allocation16], 0
    %31 = vsyncpa [#allocation19], 0
    %32 = vsyncpa [#allocation5], 0
    // Predicated region
    $region2: #{seq2seq_forward.1} parent=1 // pred_check
      _
    $region3: #{seq2seq_forward.1} parent=1 // pred_check_branch
      %34 = sbr.rel (0) target = $region5
    $region4: #{seq2seq_forward.1} parent=1 // pred_region
      _
    $region5: #{seq2seq_forward.1} parent=1 // pred_fallthru
      _
    // Predicated region
    $region6: #{seq2seq_forward.1} parent=1 // pred_check
      _
    $region7: #{seq2seq_forward.1} parent=1 // pred_check_branch
      %36 = sbr.rel (0) target = $region9
    $region8: #{seq2seq_forward.1} parent=1 // pred_region
      _
    $region9: #{seq2seq_forward.1} parent=1 // pred_fallthru
      _
    // Predicated region
    $region10: #{seq2seq_forward.1} parent=1 // pred_check
      _
    $region11: #{seq2seq_forward.1} parent=1 // pred_check_branch
      %38 = sbr.rel (0) target = $region13
    $region12: #{seq2seq_forward.1} parent=1 // pred_region
      _
    $region13: #{seq2seq_forward.1} parent=1 // pred_fallthru
      _
    // Predicated region
    $region14: #{seq2seq_forward.1} parent=1 // pred_check
      _
    $region15: #{seq2seq_forward.1} parent=1 // pred_check_branch
      %40 = sbr.rel (0) target = $region17
    $region16: #{seq2seq_forward.1} parent=1 // pred_region
      _
    $region17: #{seq2seq_forward.1} parent=1 // pred_fallthru
      _
    // Predicated region
    $region18: #{seq2seq_forward.1} parent=1 // pred_check
      _
    $region19: #{seq2seq_forward.1} parent=1 // pred_check_branch
      %42 = sbr.rel (0) target = $region21
    $region20: #{seq2seq_forward.1} parent=1 // pred_region
      _
    $region21: #{seq2seq_forward.1} parent=1 // pred_fallthru
      _
    // Predicated region
    $region22: #{seq2seq_forward.1} parent=1 // pred_check
      _
    $region23: #{seq2seq_forward.1} parent=1 // pred_check_branch
      %44 = sbr.rel (0) target = $region25
    $region24: #{seq2seq_forward.1} parent=1 // pred_region
      %s46 = ssub.s32 16, 16
      %47 = vsyncadd [#allocation4], %s46
      %s49 = sshll.u32 [#allocation3], 4
      %s50 = int_to_ptr.vmem [resolvable:$true] %s49
      %52 = dma.hbm_to_vmem [thread:$0]  %s5, 16, %s50, [#allocation4]
    $region25: #{seq2seq_forward.1} parent=1 // pred_fallthru
      _
    // Predicated region
    $region26: #{seq2seq_forward.1} parent=1 // pred_check
      _
    $region27: #{seq2seq_forward.1} parent=1 // pred_check_branch
      %54 = sbr.rel (0) target = $region29
    $region28: #{seq2seq_forward.1} parent=1 // pred_region
      %s56 = ssub.s32 16, 16
      %57 = vsyncadd [#allocation7], %s56
      %s59 = sshll.u32 [#allocation6], 4
      %s60 = int_to_ptr.vmem [resolvable:$true] %s59
      %62 = dma.hbm_to_vmem [thread:$0]  %s6, 16, %s60, [#allocation7]
    $region29: #{seq2seq_forward.1} parent=1 // pred_fallthru
      _
    // Predicated region
    $region30: #{seq2seq_forward.1} parent=1 // pred_check
      _
    $region31: #{seq2seq_forward.1} parent=1 // pred_check_branch
      %64 = sbr.rel (0) target = $region33
    $region32: #{seq2seq_forward.1} parent=1 // pred_region
      %s66 = ssub.s32 16, 16
      %67 = vsyncadd [#allocation7], %s66
      %s69 = sshll.u32 [#allocation8], 4
      %s70 = int_to_ptr.vmem [resolvable:$true] %s69
      %72 = dma.hbm_to_vmem [thread:$0]  %s7, 16, %s70, [#allocation7]
    $region33: #{seq2seq_forward.1} parent=1 // pred_fallthru
      _
    // Predicated region
    $region34: #{seq2seq_forward.1} parent=1 // pred_check
      _
    $region35: #{seq2seq_forward.1} parent=1 // pred_check_branch
      %74 = sbr.rel (0) target = $region37
    $region36: #{seq2seq_forward.1} parent=1 // pred_region
      %s76 = ssub.s32 16, 16
      %77 = vsyncadd [#allocation10], %s76
      %s79 = sshll.u32 [#allocation9], 4
      %s80 = int_to_ptr.vmem [resolvable:$true] %s79
      %82 = dma.hbm_to_vmem [thread:$0]  %s8, 16, %s80, [#allocation10]
    $region37: #{seq2seq_forward.1} parent=1 // pred_fallthru
      _
    // Predicated region
    $region38: #{seq2seq_forward.1} parent=1 // pred_check
      _
    $region39: #{seq2seq_forward.1} parent=1 // pred_check_branch
      %84 = sbr.rel (0) target = $region41
    $region40: #{seq2seq_forward.1} parent=1 // pred_region
      _
    $region41: #{seq2seq_forward.1} parent=1 // pred_fallthru
      _
    // Predicated region
    $region42: #{seq2seq_forward.1} parent=1 // pred_check
      _
    $region43: #{seq2seq_forward.1} parent=1 // pred_check_branch
      %86 = sbr.rel (0) target = $region45
    $region44: #{seq2seq_forward.1} parent=1 // pred_region
      _
    $region45: #{seq2seq_forward.1} parent=1 // pred_fallthru
      _
    // Predicated region
    $region46: #{seq2seq_forward.1} parent=1 // pred_check
      _
    $region47: #{seq2seq_forward.1} parent=1 // pred_check_branch
      %88 = sbr.rel (0) target = $region49
    $region48: #{seq2seq_forward.1} parent=1 // pred_region
      _
    $region49: #{seq2seq_forward.1} parent=1 // pred_fallthru
      _
    // Predicated region
    $region50: #{seq2seq_forward.1} parent=1 // pred_check
      _
    $region51: #{seq2seq_forward.1} parent=1 // pred_check_branch
      %90 = sbr.rel (0) target = $region53
    $region52: #{seq2seq_forward.1} parent=1 // pred_region
      %s92 = ssub.s32 16, 16
      %93 = vsyncadd [#allocation10], %s92
      %s95 = sshll.u32 [#allocation11], 4
      %s96 = int_to_ptr.vmem [resolvable:$true] %s95
      %98 = dma.hbm_to_vmem [thread:$0]  %s12, 16, %s96, [#allocation10]
    $region53: #{seq2seq_forward.1} parent=1 // pred_fallthru
      _
    // Predicated region
    $region54: #{seq2seq_forward.1} parent=1 // pred_check
      _
    $region55: #{seq2seq_forward.1} parent=1 // pred_check_branch
      %100 = sbr.rel (0) target = $region57
    $region56: #{seq2seq_forward.1} parent=1 // pred_region
      %s102 = ssub.s32 16, 16
      %103 = vsyncadd [#allocation13], %s102
      %s105 = sshll.u32 [#allocation12], 4
      %s106 = int_to_ptr.vmem [resolvable:$true] %s105
      %108 = dma.hbm_to_vmem [thread:$0]  %s13, 16, %s106, [#allocation13]
    $region57: #{seq2seq_forward.1} parent=1 // pred_fallthru
      _
    // Predicated region
    $region58: #{seq2seq_forward.1} parent=1 // pred_check
      _
    $region59: #{seq2seq_forward.1} parent=1 // pred_check_branch
      %110 = sbr.rel (0) target = $region61
    $region60: #{seq2seq_forward.1} parent=1 // pred_region
      %s112 = ssub.s32 16, 16
      %113 = vsyncadd [#allocation13], %s112
      %s115 = sshll.u32 [#allocation14], 4
      %s116 = int_to_ptr.vmem [resolvable:$true] %s115
      %118 = dma.hbm_to_vmem [thread:$0]  %s14, 16, %s116, [#allocation13]
    $region61: #{seq2seq_forward.1} parent=1 // pred_fallthru
      _
    // Predicated region
    $region62: #{seq2seq_forward.1} parent=1 // pred_check
      _
    $region63: #{seq2seq_forward.1} parent=1 // pred_check_branch
      %120 = sbr.rel (0) target = $region65
    $region64: #{seq2seq_forward.1} parent=1 // pred_region
      %s122 = ssub.s32 16, 16
      %123 = vsyncadd [#allocation16], %s122
      %s125 = sshll.u32 [#allocation15], 4
      %s126 = int_to_ptr.vmem [resolvable:$true] %s125
      %128 = dma.hbm_to_vmem [thread:$0]  %s15, 16, %s126, [#allocation16]
    $region65: #{seq2seq_forward.1} parent=1 // pred_fallthru
      _
    // Predicated region
    $region66: #{seq2seq_forward.1} parent=1 // pred_check
      _
    $region67: #{seq2seq_forward.1} parent=1 // pred_check_branch
      %130 = sbr.rel (0) target = $region69
    $region68: #{seq2seq_forward.1} parent=1 // pred_region
      _
    $region69: #{seq2seq_forward.1} parent=1 // pred_fallthru
      _
    // Predicated region
    $region70: #{seq2seq_forward.1} parent=1 // pred_check
      _
    $region71: #{seq2seq_forward.1} parent=1 // pred_check_branch
      %132 = sbr.rel (0) target = $region73
    $region72: #{seq2seq_forward.1} parent=1 // pred_region
      _
    $region73: #{seq2seq_forward.1} parent=1 // pred_fallthru
      _
    // Predicated region
    $region74: #{seq2seq_forward.1} parent=1 // pred_check
      _
    $region75: #{seq2seq_forward.1} parent=1 // pred_check_branch
      %134 = sbr.rel (0) target = $region77
    $region76: #{seq2seq_forward.1} parent=1 // pred_region
      %s136 = ssub.s32 256, 256
      %137 = vsyncadd [#allocation16], %s136
      %s138 = sshll.u32 [#allocation17], 4
      %s139 = int_to_ptr.vmem [resolvable:$true] %s138
      %144 = dma.hbm_to_vmem [thread:$0]  %s18, 256, %s139, [#allocation16], 64, 64, 4
    $region77: #{seq2seq_forward.1} parent=1 // pred_fallthru
      _
    // Predicated region
    $region78: #{seq2seq_forward.1} parent=1 // pred_check
      _
    $region79: #{seq2seq_forward.1} parent=1 // pred_check_branch
      %146 = sbr.rel (0) target = $region81
    $region80: #{seq2seq_forward.1} parent=1 // pred_region
      _
    $region81: #{seq2seq_forward.1} parent=1 // pred_fallthru
      _
    // Predicated region
    $region82: #{seq2seq_forward.1} parent=1 // pred_check
      _
    $region83: #{seq2seq_forward.1} parent=1 // pred_check_branch
      %148 = sbr.rel (0) target = $region85
    $region84: #{seq2seq_forward.1} parent=1 // pred_region
      %s150 = ssub.s32 16, 16
      %151 = vsyncadd [#allocation19], %s150
      %s153 = sshll.u32 [#allocation18], 4
      %s154 = int_to_ptr.vmem [resolvable:$true] %s153
      %156 = dma.hbm_to_vmem [thread:$0]  %s20, 16, %s154, [#allocation19]
    $region85: #{seq2seq_forward.1} parent=1 // pred_fallthru
      _
    // Predicated region
    $region86: #{seq2seq_forward.1} parent=1 // pred_check
      _
    $region87: #{seq2seq_forward.1} parent=1 // pred_check_branch
      %158 = sbr.rel (0) target = $region89
    $region88: #{seq2seq_forward.1} parent=1 // pred_region
      %159 = dma.done [#allocation4], 16
    $region89: #{seq2seq_forward.1} parent=1 // pred_fallthru
      _
    // Predicated region
    $region90: #{seq2seq_forward.1} parent=1 // pred_check
      _
    $region91: #{seq2seq_forward.1} parent=1 // pred_check_branch
      %161 = sbr.rel (0) target = $region93
    $region92: #{seq2seq_forward.1} parent=1 // pred_region
      %162 = dma.done [#allocation7], 16
    $region93: #{seq2seq_forward.1} parent=1 // pred_fallthru
      _
    // Predicated region
    $region94: #{seq2seq_forward.1} parent=1 // pred_check
      _
    $region95: #{seq2seq_forward.1} parent=1 // pred_check_branch
      %164 = sbr.rel (0) target = $region97
    $region96: #{seq2seq_forward.1} parent=1 // pred_region
      %165 = dma.done [#allocation7], 16
    $region97: #{seq2seq_forward.1} parent=1 // pred_fallthru
      _
    // Predicated region
    $region98: #{seq2seq_forward.1} parent=1 // pred_check
      _
    $region99: #{seq2seq_forward.1} parent=1 // pred_check_branch
      %167 = sbr.rel (0) target = $region101
    $region100: #{seq2seq_forward.1} parent=1 // pred_region
      %168 = dma.done [#allocation10], 16
    $region101: #{seq2seq_forward.1} parent=1 // pred_fallthru
      _
    // Predicated region
    $region102: #{seq2seq_forward.1} parent=1 // pred_check
      _
    $region103: #{seq2seq_forward.1} parent=1 // pred_check_branch
      %170 = sbr.rel (0) target = $region105
    $region104: #{seq2seq_forward.1} parent=1 // pred_region
      %171 = dma.done [#allocation10], 16
    $region105: #{seq2seq_forward.1} parent=1 // pred_fallthru
      _
    // Predicated region
    $region106: #{seq2seq_forward.1} parent=1 // pred_check
      _
    $region107: #{seq2seq_forward.1} parent=1 // pred_check_branch
      %173 = sbr.rel (0) target = $region109
    $region108: #{seq2seq_forward.1} parent=1 // pred_region
      %174 = dma.done [#allocation13], 16
    $region109: #{seq2seq_forward.1} parent=1 // pred_fallthru
      _
    // Predicated region
    $region110: #{seq2seq_forward.1} parent=1 // pred_check
      _
    $region111: #{seq2seq_forward.1} parent=1 // pred_check_branch
      %176 = sbr.rel (0) target = $region113
    $region112: #{seq2seq_forward.1} parent=1 // pred_region
      %177 = dma.done [#allocation13], 16
    $region113: #{seq2seq_forward.1} parent=1 // pred_fallthru
      _
    // Predicated region
    $region114: #{seq2seq_forward.1} parent=1 // pred_check
      _
    $region115: #{seq2seq_forward.1} parent=1 // pred_check_branch
      %179 = sbr.rel (0) target = $region117
    $region116: #{seq2seq_forward.1} parent=1 // pred_region
      %180 = dma.done [#allocation16], 16
    $region117: #{seq2seq_forward.1} parent=1 // pred_fallthru
      _
    // Predicated region
    $region118: #{seq2seq_forward.1} parent=1 // pred_check
      _
    $region119: #{seq2seq_forward.1} parent=1 // pred_check_branch
      %182 = sbr.rel (0) target = $region121
    $region120: #{seq2seq_forward.1} parent=1 // pred_region
      %183 = dma.done [#allocation16], 256
    $region121: #{seq2seq_forward.1} parent=1 // pred_fallthru
      _
    // Predicated region
    $region122: #{seq2seq_forward.1} parent=1 // pred_check
      _
    $region123: #{seq2seq_forward.1} parent=1 // pred_check_branch
      %185 = sbr.rel (0) target = $region125
    $region124: #{seq2seq_forward.1} parent=1 // pred_region
      %186 = dma.done [#allocation19], 16
    $region125: #{seq2seq_forward.1} parent=1 // pred_fallthru
      _
    %v188 = vld [vmem:[%s0] sm:$0x1]
    %v189 = vld [vmem:[%s2] sm:$0xf]
    %v190 = vld [vmem:[%s2 + $0x4] sm:$0xf]
    %v191 = vld [vmem:[%s2 + $0x8] sm:$0xf]
    %v192 = vld [vmem:[%s2 + $0xc] sm:$0xf]
    %v193 = vpack.c.bf16 %v188, %v188
    %v194 = vld [vmem:[#allocation3] sm:$0x1]
    %v199 = vunpack.c.l.b16 %v189
    %v200 = vunpack.c.l.b16 %v190
    %v201 = vunpack.c.l.b16 %v191
    %v202 = vunpack.c.l.b16 %v192
    %v203 = vpack.c.b16 %v200, %v199
    %v204 = vpack.c.b16 %v202, %v201
    %vm207 = vcmask 261120
    %v209 = vsel %vm207, %v193, 0
    %211 = vmatprep.subr.bf16.mxu0 0
    %212 = vmatpush1.bf16.msra.mxu0 0
    %213 = vmatprep.subr.bf16.mxu0 0
    %214 = vmatpush1.bf16.msra.mxu0 0
    %215 = vmatprep.subr.bf16.mxu0 0
    %216 = vmatpush1.bf16.msra.mxu0 0
    %217 = vmatprep.subr.bf16.mxu0 0
    %218 = vmatpush1.bf16.msra.mxu0 0
    %219 = vmatprep.subr.bf16.mxu0 0
    %220 = vmatpush1.bf16.msra.mxu0 0
    %221 = vmatprep.subr.bf16.mxu0 0
    %222 = vmatpush1.bf16.msra.mxu0 0
    %223 = vmatprep.subr.bf16.mxu0 0
    %224 = vmatpush1.bf16.msra.mxu0 %v204
    %225 = vmatprep.subr.bf16.mxu0 0
    %226 = vmatpush1.bf16.msra.mxu0 %v203
    %227 = vmatprep.subr.bf16.mxu0 0
    %228 = vmatpush2.bf16.msra.mxu0 0
    %229 = vmatprep.subr.bf16.mxu0 0
    %230 = vmatpush2.bf16.msra.mxu0 0
    %231 = vmatprep.subr.bf16.mxu0 0
    %232 = vmatpush2.bf16.msra.mxu0 0
    %233 = vmatprep.subr.bf16.mxu0 0
    %234 = vmatpush2.bf16.msra.mxu0 0
    %235 = vmatprep.subr.bf16.mxu0 0
    %236 = vmatpush2.bf16.msra.mxu0 0
    %237 = vmatprep.subr.bf16.mxu0 0
    %238 = vmatpush2.bf16.msra.mxu0 0
    %239 = vmatprep.subr.bf16.mxu0 0
    %240 = vmatpush2.bf16.msra.mxu0 0
    %241 = vmatprep.subr.bf16.mxu0 0
    %242 = vmatpush2.bf16.msra.mxu0 0
    %243 = vmatprep.mubr.bf16.mxu0 0
    %244 = vmatmul.mubr.bf16.gmra.mxu0 %v209
    %v245 = vpop.f32.mrf.mxu0
    %v246 = vadd.f32 %v194, %v245
    %v247 = vpop.f32.mrf.mxu0
    %v248 = vpop.f32.mrf.mxu0
    %v249 = vpop.f32.mrf.mxu0
    %250 = vdwg.mxu0
    %v251 = vxor.u32 %v246, 2147483648
    %v252 = vmul.f32 %v251, 1.442695
    %v253 = vpow.pop %v252
    %v254 = vadd.f32 %v253, 1.0
    %v255 = vrcp.pop %v254
    %v256 = vmul.f32 1.0, %v255
    %v257 = vld [vmem:[%s3] sm:$0xf]
    %v258 = vld [vmem:[%s3 + $0x4] sm:$0xf]
    %v259 = vld [vmem:[%s3 + $0x8] sm:$0xf]
    %v260 = vld [vmem:[%s3 + $0xc] sm:$0xf]
    %v261 = vld [vmem:[#allocation6] sm:$0x1]
    %v266 = vunpack.c.l.b16 %v257
    %v267 = vunpack.c.l.b16 %v258
    %v268 = vunpack.c.l.b16 %v259
    %v269 = vunpack.c.l.b16 %v260
    %v270 = vpack.c.b16 %v267, %v266
    %v271 = vpack.c.b16 %v269, %v268
    %274 = vmatprep.subr.bf16.mxu0 0
    %275 = vmatpush1.bf16.msra.mxu0 0
    %276 = vmatprep.subr.bf16.mxu0 0
    %277 = vmatpush1.bf16.msra.mxu0 0
    %278 = vmatprep.subr.bf16.mxu0 0
    %279 = vmatpush1.bf16.msra.mxu0 0
    %280 = vmatprep.subr.bf16.mxu0 0
    %281 = vmatpush1.bf16.msra.mxu0 0
    %282 = vmatprep.subr.bf16.mxu0 0
    %283 = vmatpush1.bf16.msra.mxu0 0
    %284 = vmatprep.subr.bf16.mxu0 0
    %285 = vmatpush1.bf16.msra.mxu0 0
    %286 = vmatprep.subr.bf16.mxu0 0
    %287 = vmatpush1.bf16.msra.mxu0 %v271
    %288 = vmatprep.subr.bf16.mxu0 0
    %289 = vmatpush1.bf16.msra.mxu0 %v270
    %290 = vmatprep.subr.bf16.mxu0 0
    %291 = vmatpush2.bf16.msra.mxu0 0
    %292 = vmatprep.subr.bf16.mxu0 0
    %293 = vmatpush2.bf16.msra.mxu0 0
    %294 = vmatprep.subr.bf16.mxu0 0
    %295 = vmatpush2.bf16.msra.mxu0 0
    %296 = vmatprep.subr.bf16.mxu0 0
    %297 = vmatpush2.bf16.msra.mxu0 0
    %298 = vmatprep.subr.bf16.mxu0 0
    %299 = vmatpush2.bf16.msra.mxu0 0
    %300 = vmatprep.subr.bf16.mxu0 0
    %301 = vmatpush2.bf16.msra.mxu0 0
    %302 = vmatprep.subr.bf16.mxu0 0
    %303 = vmatpush2.bf16.msra.mxu0 0
    %304 = vmatprep.subr.bf16.mxu0 0
    %305 = vmatpush2.bf16.msra.mxu0 0
    %306 = vmatprep.mubr.bf16.mxu0 0
    %307 = vmatmul.mubr.bf16.gmra.mxu0 %v209
    %v308 = vpop.f32.mrf.mxu0
    %v309 = vadd.f32 %v261, %v308
    %v310 = vpop.f32.mrf.mxu0
    %v311 = vpop.f32.mrf.mxu0
    %v312 = vpop.f32.mrf.mxu0
    %313 = vdwg.mxu0
    %v314 = vxor.u32 %v309, 2147483648
    %v315 = vmul.f32 %v314, 1.442695
    %v316 = vpow.pop %v315
    %v317 = vadd.f32 %v316, 1.0
    %v318 = vrcp.pop %v317
    %v319 = vmul.f32 1.0, %v318
    %v320 = vld [vmem:[%s4] sm:$0xf]
    %v321 = vld [vmem:[%s4 + $0x4] sm:$0xf]
    %v322 = vld [vmem:[%s4 + $0x8] sm:$0xf]
    %v323 = vld [vmem:[%s4 + $0xc] sm:$0xf]
    %v324 = vld [vmem:[#allocation8] sm:$0x1]
    %v329 = vunpack.c.l.b16 %v320
    %v330 = vunpack.c.l.b16 %v321
    %v331 = vunpack.c.l.b16 %v322
    %v332 = vunpack.c.l.b16 %v323
    %v333 = vpack.c.b16 %v330, %v329
    %v334 = vpack.c.b16 %v332, %v331
    %337 = vmatprep.subr.bf16.mxu0 0
    %338 = vmatpush1.bf16.msra.mxu0 0
    %339 = vmatprep.subr.bf16.mxu0 0
    %340 = vmatpush1.bf16.msra.mxu0 0
    %341 = vmatprep.subr.bf16.mxu0 0
    %342 = vmatpush1.bf16.msra.mxu0 0
    %343 = vmatprep.subr.bf16.mxu0 0
    %344 = vmatpush1.bf16.msra.mxu0 0
    %345 = vmatprep.subr.bf16.mxu0 0
    %346 = vmatpush1.bf16.msra.mxu0 0
    %347 = vmatprep.subr.bf16.mxu0 0
    %348 = vmatpush1.bf16.msra.mxu0 0
    %349 = vmatprep.subr.bf16.mxu0 0
    %350 = vmatpush1.bf16.msra.mxu0 %v334
    %351 = vmatprep.subr.bf16.mxu0 0
    %352 = vmatpush1.bf16.msra.mxu0 %v333
    %353 = vmatprep.subr.bf16.mxu0 0
    %354 = vmatpush2.bf16.msra.mxu0 0
    %355 = vmatprep.subr.bf16.mxu0 0
    %356 = vmatpush2.bf16.msra.mxu0 0
    %357 = vmatprep.subr.bf16.mxu0 0
    %358 = vmatpush2.bf16.msra.mxu0 0
    %359 = vmatprep.subr.bf16.mxu0 0
    %360 = vmatpush2.bf16.msra.mxu0 0
    %361 = vmatprep.subr.bf16.mxu0 0
    %362 = vmatpush2.bf16.msra.mxu0 0
    %363 = vmatprep.subr.bf16.mxu0 0
    %364 = vmatpush2.bf16.msra.mxu0 0
    %365 = vmatprep.subr.bf16.mxu0 0
    %366 = vmatpush2.bf16.msra.mxu0 0
    %367 = vmatprep.subr.bf16.mxu0 0
    %368 = vmatpush2.bf16.msra.mxu0 0
    %369 = vmatprep.mubr.bf16.mxu0 0
    %370 = vmatmul.mubr.bf16.gmra.mxu0 %v209
    %v371 = vpop.f32.mrf.mxu0
    %v372 = vadd.f32 %v324, %v371
    %v373 = vpop.f32.mrf.mxu0
    %v374 = vpop.f32.mrf.mxu0
    %v375 = vpop.f32.mrf.mxu0
    %376 = vdwg.mxu0
    %v377 = vld [vmem:[#allocation9] sm:$0x1]
    %v378 = vmul.f32 %v256, %v377
    %v379 = vadd.f32 %v372, %v378
    %v380 = vtanh.pop %v379
    %v381 = vsub.f32 1.0, %v319
    %v382 = vmul.f32 %v381, %v380
    %v383 = vld [vmem:[%s1] sm:$0x1]
    %v384 = vld [vmem:[%s9] sm:$0xf]
    %v385 = vld [vmem:[%s9 + $0x4] sm:$0xf]
    %v386 = vld [vmem:[%s9 + $0x8] sm:$0xf]
    %v387 = vld [vmem:[%s9 + $0xc] sm:$0xf]
    %v388 = vpack.c.bf16 %v383, %v383
    %v389 = vld [vmem:[#allocation11] sm:$0x1]
    %v394 = vunpack.c.l.b16 %v384
    %v395 = vunpack.c.l.b16 %v385
    %v396 = vunpack.c.l.b16 %v386
    %v397 = vunpack.c.l.b16 %v387
    %v398 = vpack.c.b16 %v395, %v394
    %v399 = vpack.c.b16 %v397, %v396
    %v403 = vsel %vm207, %v388, 0
    %405 = vmatprep.subr.bf16.mxu0 0
    %406 = vmatpush1.bf16.msra.mxu0 0
    %407 = vmatprep.subr.bf16.mxu0 0
    %408 = vmatpush1.bf16.msra.mxu0 0
    %409 = vmatprep.subr.bf16.mxu0 0
    %410 = vmatpush1.bf16.msra.mxu0 0
    %411 = vmatprep.subr.bf16.mxu0 0
    %412 = vmatpush1.bf16.msra.mxu0 0
    %413 = vmatprep.subr.bf16.mxu0 0
    %414 = vmatpush1.bf16.msra.mxu0 0
    %415 = vmatprep.subr.bf16.mxu0 0
    %416 = vmatpush1.bf16.msra.mxu0 0
    %417 = vmatprep.subr.bf16.mxu0 0
    %418 = vmatpush1.bf16.msra.mxu0 %v399
    %419 = vmatprep.subr.bf16.mxu0 0
    %420 = vmatpush1.bf16.msra.mxu0 %v398
    %421 = vmatprep.subr.bf16.mxu0 0
    %422 = vmatpush2.bf16.msra.mxu0 0
    %423 = vmatprep.subr.bf16.mxu0 0
    %424 = vmatpush2.bf16.msra.mxu0 0
    %425 = vmatprep.subr.bf16.mxu0 0
    %426 = vmatpush2.bf16.msra.mxu0 0
    %427 = vmatprep.subr.bf16.mxu0 0
    %428 = vmatpush2.bf16.msra.mxu0 0
    %429 = vmatprep.subr.bf16.mxu0 0
    %430 = vmatpush2.bf16.msra.mxu0 0
    %431 = vmatprep.subr.bf16.mxu0 0
    %432 = vmatpush2.bf16.msra.mxu0 0
    %433 = vmatprep.subr.bf16.mxu0 0
    %434 = vmatpush2.bf16.msra.mxu0 0
    %435 = vmatprep.subr.bf16.mxu0 0
    %436 = vmatpush2.bf16.msra.mxu0 0
    %437 = vmatprep.mubr.bf16.mxu0 0
    %438 = vmatmul.mubr.bf16.gmra.mxu0 %v403
    %v439 = vpop.f32.mrf.mxu0
    %v440 = vadd.f32 %v389, %v439
    %v441 = vpop.f32.mrf.mxu0
    %v442 = vpop.f32.mrf.mxu0
    %v443 = vpop.f32.mrf.mxu0
    %444 = vdwg.mxu0
    %v445 = vld [vmem:[%s10] sm:$0xf]
    %v446 = vld [vmem:[%s10 + $0x4] sm:$0xf]
    %v447 = vld [vmem:[%s10 + $0x8] sm:$0xf]
    %v448 = vld [vmem:[%s10 + $0xc] sm:$0xf]
    %v449 = vld [vmem:[#allocation12] sm:$0x1]
    %v454 = vunpack.c.l.b16 %v445
    %v455 = vunpack.c.l.b16 %v446
    %v456 = vunpack.c.l.b16 %v447
    %v457 = vunpack.c.l.b16 %v448
    %v458 = vpack.c.b16 %v455, %v454
    %v459 = vpack.c.b16 %v457, %v456
    %462 = vmatprep.subr.bf16.mxu0 0
    %463 = vmatpush1.bf16.msra.mxu0 0
    %464 = vmatprep.subr.bf16.mxu0 0
    %465 = vmatpush1.bf16.msra.mxu0 0
    %466 = vmatprep.subr.bf16.mxu0 0
    %467 = vmatpush1.bf16.msra.mxu0 0
    %468 = vmatprep.subr.bf16.mxu0 0
    %469 = vmatpush1.bf16.msra.mxu0 0
    %470 = vmatprep.subr.bf16.mxu0 0
    %471 = vmatpush1.bf16.msra.mxu0 0
    %472 = vmatprep.subr.bf16.mxu0 0
    %473 = vmatpush1.bf16.msra.mxu0 0
    %474 = vmatprep.subr.bf16.mxu0 0
    %475 = vmatpush1.bf16.msra.mxu0 %v459
    %476 = vmatprep.subr.bf16.mxu0 0
    %477 = vmatpush1.bf16.msra.mxu0 %v458
    %478 = vmatprep.subr.bf16.mxu0 0
    %479 = vmatpush2.bf16.msra.mxu0 0
    %480 = vmatprep.subr.bf16.mxu0 0
    %481 = vmatpush2.bf16.msra.mxu0 0
    %482 = vmatprep.subr.bf16.mxu0 0
    %483 = vmatpush2.bf16.msra.mxu0 0
    %484 = vmatprep.subr.bf16.mxu0 0
    %485 = vmatpush2.bf16.msra.mxu0 0
    %486 = vmatprep.subr.bf16.mxu0 0
    %487 = vmatpush2.bf16.msra.mxu0 0
    %488 = vmatprep.subr.bf16.mxu0 0
    %489 = vmatpush2.bf16.msra.mxu0 0
    %490 = vmatprep.subr.bf16.mxu0 0
    %491 = vmatpush2.bf16.msra.mxu0 0
    %492 = vmatprep.subr.bf16.mxu0 0
    %493 = vmatpush2.bf16.msra.mxu0 0
    %494 = vmatprep.mubr.bf16.mxu0 0
    %495 = vmatmul.mubr.bf16.gmra.mxu0 %v403
    %v496 = vpop.f32.mrf.mxu0
    %v497 = vadd.f32 %v449, %v496
    %v498 = vpop.f32.mrf.mxu0
    %v499 = vpop.f32.mrf.mxu0
    %v500 = vpop.f32.mrf.mxu0
    %501 = vdwg.mxu0
    %v502 = vld [vmem:[%s11] sm:$0xf]
    %v503 = vld [vmem:[%s11 + $0x4] sm:$0xf]
    %v504 = vld [vmem:[%s11 + $0x8] sm:$0xf]
    %v505 = vld [vmem:[%s11 + $0xc] sm:$0xf]
    %v506 = vld [vmem:[#allocation14] sm:$0x1]
    %v511 = vunpack.c.l.b16 %v502
    %v512 = vunpack.c.l.b16 %v503
    %v513 = vunpack.c.l.b16 %v504
    %v514 = vunpack.c.l.b16 %v505
    %v515 = vpack.c.b16 %v512, %v511
    %v516 = vpack.c.b16 %v514, %v513
    %519 = vmatprep.subr.bf16.mxu0 0
    %520 = vmatpush1.bf16.msra.mxu0 0
    %521 = vmatprep.subr.bf16.mxu0 0
    %522 = vmatpush1.bf16.msra.mxu0 0
    %523 = vmatprep.subr.bf16.mxu0 0
    %524 = vmatpush1.bf16.msra.mxu0 0
    %525 = vmatprep.subr.bf16.mxu0 0
    %526 = vmatpush1.bf16.msra.mxu0 0
    %527 = vmatprep.subr.bf16.mxu0 0
    %528 = vmatpush1.bf16.msra.mxu0 0
    %529 = vmatprep.subr.bf16.mxu0 0
    %530 = vmatpush1.bf16.msra.mxu0 0
    %531 = vmatprep.subr.bf16.mxu0 0
    %532 = vmatpush1.bf16.msra.mxu0 %v516
    %533 = vmatprep.subr.bf16.mxu0 0
    %534 = vmatpush1.bf16.msra.mxu0 %v515
    %535 = vmatprep.subr.bf16.mxu0 0
    %536 = vmatpush2.bf16.msra.mxu0 0
    %537 = vmatprep.subr.bf16.mxu0 0
    %538 = vmatpush2.bf16.msra.mxu0 0
    %539 = vmatprep.subr.bf16.mxu0 0
    %540 = vmatpush2.bf16.msra.mxu0 0
    %541 = vmatprep.subr.bf16.mxu0 0
    %542 = vmatpush2.bf16.msra.mxu0 0
    %543 = vmatprep.subr.bf16.mxu0 0
    %544 = vmatpush2.bf16.msra.mxu0 0
    %545 = vmatprep.subr.bf16.mxu0 0
    %546 = vmatpush2.bf16.msra.mxu0 0
    %547 = vmatprep.subr.bf16.mxu0 0
    %548 = vmatpush2.bf16.msra.mxu0 0
    %549 = vmatprep.subr.bf16.mxu0 0
    %550 = vmatpush2.bf16.msra.mxu0 0
    %551 = vmatprep.mubr.bf16.mxu0 0
    %552 = vmatmul.mubr.bf16.gmra.mxu0 %v403
    %v553 = vpop.f32.mrf.mxu0
    %v554 = vadd.f32 %v506, %v553
    %v555 = vpop.f32.mrf.mxu0
    %v556 = vpop.f32.mrf.mxu0
    %v557 = vpop.f32.mrf.mxu0
    %558 = vdwg.mxu0
    %v559 = vld [vmem:[#allocation15] sm:$0x1]
    %v560 = vld [vmem:[%s16] sm:$0xf]
    %v561 = vld [vmem:[%s16 + $0x4] sm:$0xf]
    %v562 = vld [vmem:[%s16 + $0x8] sm:$0xf]
    %v563 = vld [vmem:[%s16 + $0xc] sm:$0xf]
    %v564 = vld [vmem:[%s17] sm:$0xf]
    %v565 = vld [vmem:[%s17 + $0x4] sm:$0xf]
    %v566 = vld [vmem:[%s17 + $0x8] sm:$0xf]
    %v567 = vld [vmem:[%s17 + $0xc] sm:$0xf]
    %v568 = vld [vmem:[#allocation17] sm:$0xf]
    %v569 = vld [vmem:[#allocation17 + $0x4] sm:$0xf]
    %v570 = vld [vmem:[#allocation17 + $0x8] sm:$0xf]
    %v571 = vld [vmem:[#allocation17 + $0xc] sm:$0xf]
    %v572 = vpack.c.bf16 %v382, %v382
    %v577 = vunpack.c.l.b16 %v560
    %v578 = vunpack.c.l.b16 %v561
    %v579 = vunpack.c.l.b16 %v562
    %v580 = vunpack.c.l.b16 %v563
    %v581 = vpack.c.b16 %v578, %v577
    %v582 = vpack.c.b16 %v580, %v579
    %v586 = vsel %vm207, %v572, 0
    %588 = vmatprep.subr.bf16.mxu0 0
    %589 = vmatpush1.bf16.msra.mxu0 0
    %590 = vmatprep.subr.bf16.mxu0 0
    %591 = vmatpush1.bf16.msra.mxu0 0
    %592 = vmatprep.subr.bf16.mxu0 0
    %593 = vmatpush1.bf16.msra.mxu0 0
    %594 = vmatprep.subr.bf16.mxu0 0
    %595 = vmatpush1.bf16.msra.mxu0 0
    %596 = vmatprep.subr.bf16.mxu0 0
    %597 = vmatpush1.bf16.msra.mxu0 0
    %598 = vmatprep.subr.bf16.mxu0 0
    %599 = vmatpush1.bf16.msra.mxu0 0
    %600 = vmatprep.subr.bf16.mxu0 0
    %601 = vmatpush1.bf16.msra.mxu0 %v582
    %602 = vmatprep.subr.bf16.mxu0 0
    %603 = vmatpush1.bf16.msra.mxu0 %v581
    %604 = vmatprep.subr.bf16.mxu0 0
    %605 = vmatpush2.bf16.msra.mxu0 0
    %606 = vmatprep.subr.bf16.mxu0 0
    %607 = vmatpush2.bf16.msra.mxu0 0
    %608 = vmatprep.subr.bf16.mxu0 0
    %609 = vmatpush2.bf16.msra.mxu0 0
    %610 = vmatprep.subr.bf16.mxu0 0
    %611 = vmatpush2.bf16.msra.mxu0 0
    %612 = vmatprep.subr.bf16.mxu0 0
    %613 = vmatpush2.bf16.msra.mxu0 0
    %614 = vmatprep.subr.bf16.mxu0 0
    %615 = vmatpush2.bf16.msra.mxu0 0
    %616 = vmatprep.subr.bf16.mxu0 0
    %617 = vmatpush2.bf16.msra.mxu0 0
    %618 = vmatprep.subr.bf16.mxu0 0
    %619 = vmatpush2.bf16.msra.mxu0 0
    %620 = vmatprep.mubr.bf16.mxu0 0
    %621 = vmatmul.mubr.bf16.gmra.mxu0 %v586
    %v622 = vpop.f32.mrf.mxu0
    %v623 = vadd.f32 0.0, %v622
    %v624 = vpop.f32.mrf.mxu0
    %v625 = vpop.f32.mrf.mxu0
    %v626 = vpop.f32.mrf.mxu0
    %627 = vdwg.mxu0
    %v628 = vadd.f32 %v440, %v623
    %v629 = vxor.u32 %v628, 2147483648
    %v630 = vmul.f32 %v629, 1.442695
    %v631 = vpow.pop %v630
    %v632 = vadd.f32 %v631, 1.0
    %v633 = vrcp.pop %v632
    %v634 = vmul.f32 1.0, %v633
    %v639 = vunpack.c.l.b16 %v564
    %v640 = vunpack.c.l.b16 %v565
    %v641 = vunpack.c.l.b16 %v566
    %v642 = vunpack.c.l.b16 %v567
    %v643 = vpack.c.b16 %v640, %v639
    %v644 = vpack.c.b16 %v642, %v641
    %647 = vmatprep.subr.bf16.mxu0 0
    %648 = vmatpush1.bf16.msra.mxu0 0
    %649 = vmatprep.subr.bf16.mxu0 0
    %650 = vmatpush1.bf16.msra.mxu0 0
    %651 = vmatprep.subr.bf16.mxu0 0
    %652 = vmatpush1.bf16.msra.mxu0 0
    %653 = vmatprep.subr.bf16.mxu0 0
    %654 = vmatpush1.bf16.msra.mxu0 0
    %655 = vmatprep.subr.bf16.mxu0 0
    %656 = vmatpush1.bf16.msra.mxu0 0
    %657 = vmatprep.subr.bf16.mxu0 0
    %658 = vmatpush1.bf16.msra.mxu0 0
    %659 = vmatprep.subr.bf16.mxu0 0
    %660 = vmatpush1.bf16.msra.mxu0 %v644
    %661 = vmatprep.subr.bf16.mxu0 0
    %662 = vmatpush1.bf16.msra.mxu0 %v643
    %663 = vmatprep.subr.bf16.mxu0 0
    %664 = vmatpush2.bf16.msra.mxu0 0
    %665 = vmatprep.subr.bf16.mxu0 0
    %666 = vmatpush2.bf16.msra.mxu0 0
    %667 = vmatprep.subr.bf16.mxu0 0
    %668 = vmatpush2.bf16.msra.mxu0 0
    %669 = vmatprep.subr.bf16.mxu0 0
    %670 = vmatpush2.bf16.msra.mxu0 0
    %671 = vmatprep.subr.bf16.mxu0 0
    %672 = vmatpush2.bf16.msra.mxu0 0
    %673 = vmatprep.subr.bf16.mxu0 0
    %674 = vmatpush2.bf16.msra.mxu0 0
    %675 = vmatprep.subr.bf16.mxu0 0
    %676 = vmatpush2.bf16.msra.mxu0 0
    %677 = vmatprep.subr.bf16.mxu0 0
    %678 = vmatpush2.bf16.msra.mxu0 0
    %679 = vmatprep.mubr.bf16.mxu0 0
    %680 = vmatmul.mubr.bf16.gmra.mxu0 %v586
    %v681 = vpop.f32.mrf.mxu0
    %v682 = vadd.f32 0.0, %v681
    %v683 = vpop.f32.mrf.mxu0
    %v684 = vpop.f32.mrf.mxu0
    %v685 = vpop.f32.mrf.mxu0
    %686 = vdwg.mxu0
    %v687 = vadd.f32 %v497, %v682
    %v688 = vxor.u32 %v687, 2147483648
    %v689 = vmul.f32 %v688, 1.442695
    %v690 = vpow.pop %v689
    %v691 = vadd.f32 %v690, 1.0
    %v692 = vrcp.pop %v691
    %v693 = vmul.f32 1.0, %v692
    %v698 = vunpack.c.l.b16 %v568
    %v699 = vunpack.c.l.b16 %v569
    %v700 = vunpack.c.l.b16 %v570
    %v701 = vunpack.c.l.b16 %v571
    %v702 = vpack.c.b16 %v699, %v698
    %v703 = vpack.c.b16 %v701, %v700
    %706 = vmatprep.subr.bf16.mxu0 0
    %707 = vmatpush1.bf16.msra.mxu0 0
    %708 = vmatprep.subr.bf16.mxu0 0
    %709 = vmatpush1.bf16.msra.mxu0 0
    %710 = vmatprep.subr.bf16.mxu0 0
    %711 = vmatpush1.bf16.msra.mxu0 0
    %712 = vmatprep.subr.bf16.mxu0 0
    %713 = vmatpush1.bf16.msra.mxu0 0
    %714 = vmatprep.subr.bf16.mxu0 0
    %715 = vmatpush1.bf16.msra.mxu0 0
    %716 = vmatprep.subr.bf16.mxu0 0
    %717 = vmatpush1.bf16.msra.mxu0 0
    %718 = vmatprep.subr.bf16.mxu0 0
    %719 = vmatpush1.bf16.msra.mxu0 %v703
    %720 = vmatprep.subr.bf16.mxu0 0
    %721 = vmatpush1.bf16.msra.mxu0 %v702
    %722 = vmatprep.subr.bf16.mxu0 0
    %723 = vmatpush2.bf16.msra.mxu0 0
    %724 = vmatprep.subr.bf16.mxu0 0
    %725 = vmatpush2.bf16.msra.mxu0 0
    %726 = vmatprep.subr.bf16.mxu0 0
    %727 = vmatpush2.bf16.msra.mxu0 0
    %728 = vmatprep.subr.bf16.mxu0 0
    %729 = vmatpush2.bf16.msra.mxu0 0
    %730 = vmatprep.subr.bf16.mxu0 0
    %731 = vmatpush2.bf16.msra.mxu0 0
    %732 = vmatprep.subr.bf16.mxu0 0
    %733 = vmatpush2.bf16.msra.mxu0 0
    %734 = vmatprep.subr.bf16.mxu0 0
    %735 = vmatpush2.bf16.msra.mxu0 0
    %736 = vmatprep.subr.bf16.mxu0 0
    %737 = vmatpush2.bf16.msra.mxu0 0
    %738 = vmatprep.mubr.bf16.mxu0 0
    %739 = vmatmul.mubr.bf16.gmra.mxu0 %v586
    %v740 = vpop.f32.mrf.mxu0
    %v741 = vadd.f32 %v559, %v740
    %v742 = vpop.f32.mrf.mxu0
    %v743 = vpop.f32.mrf.mxu0
    %v744 = vpop.f32.mrf.mxu0
    %745 = vdwg.mxu0
    %v746 = vmul.f32 %v634, %v741
    %v747 = vadd.f32 %v554, %v746
    %v748 = vtanh.pop %v747
    %v749 = vsub.f32 1.0, %v693
    %v750 = vmul.f32 %v749, %v748
    %v751 = vmul.f32 %v693, %v382
    %v752 = vadd.f32 %v750, %v751
    %vm753 = vcmask 253952
    %754 = vst.msk [vmem:[#allocation2] sm:$0x1] %vm753, %v752
    %v755 = vpack.c.bf16 %v752, %v752
    %v757 = vsel %vm207, %v755, 0
    %759 = vmatprep.subr.bf16.mxu0 0
    %760 = vmatpush1.bf16.msra.mxu0 0
    %761 = vmatprep.subr.bf16.mxu0 0
    %762 = vmatpush1.bf16.msra.mxu0 0
    %763 = vmatprep.subr.bf16.mxu0 0
    %764 = vmatpush1.bf16.msra.mxu0 0
    %765 = vmatprep.subr.bf16.mxu0 0
    %766 = vmatpush1.bf16.msra.mxu0 0
    %767 = vmatprep.subr.bf16.mxu0 0
    %768 = vmatpush1.bf16.msra.mxu0 0
    %769 = vmatprep.subr.bf16.mxu0 0
    %770 = vmatpush1.bf16.msra.mxu0 0
    %771 = vmatprep.subr.bf16.mxu0 0
    %772 = vmatpush1.bf16.msra.mxu0 %v582
    %773 = vmatprep.subr.bf16.mxu0 0
    %774 = vmatpush1.bf16.msra.mxu0 %v581
    %775 = vmatprep.subr.bf16.mxu0 0
    %776 = vmatpush2.bf16.msra.mxu0 0
    %777 = vmatprep.subr.bf16.mxu0 0
    %778 = vmatpush2.bf16.msra.mxu0 0
    %779 = vmatprep.subr.bf16.mxu0 0
    %780 = vmatpush2.bf16.msra.mxu0 0
    %781 = vmatprep.subr.bf16.mxu0 0
    %782 = vmatpush2.bf16.msra.mxu0 0
    %783 = vmatprep.subr.bf16.mxu0 0
    %784 = vmatpush2.bf16.msra.mxu0 0
    %785 = vmatprep.subr.bf16.mxu0 0
    %786 = vmatpush2.bf16.msra.mxu0 0
    %787 = vmatprep.subr.bf16.mxu0 0
    %788 = vmatpush2.bf16.msra.mxu0 0
    %789 = vmatprep.subr.bf16.mxu0 0
    %790 = vmatpush2.bf16.msra.mxu0 0
    %791 = vmatprep.mubr.bf16.mxu0 0
    %792 = vmatmul.mubr.bf16.gmra.mxu0 %v757
    %v793 = vpop.f32.mrf.mxu0
    %v794 = vadd.f32 0.0, %v793
    %v795 = vpop.f32.mrf.mxu0
    %v796 = vpop.f32.mrf.mxu0
    %v797 = vpop.f32.mrf.mxu0
    %798 = vdwg.mxu0
    %v799 = vadd.f32 %v440, %v794
    %v800 = vxor.u32 %v799, 2147483648
    %v801 = vmul.f32 %v800, 1.442695
    %v802 = vpow.pop %v801
    %v803 = vadd.f32 %v802, 1.0
    %v804 = vrcp.pop %v803
    %v805 = vmul.f32 1.0, %v804
    %806 = vmatprep.subr.bf16.mxu0 0
    %807 = vmatpush1.bf16.msra.mxu0 0
    %808 = vmatprep.subr.bf16.mxu0 0
    %809 = vmatpush1.bf16.msra.mxu0 0
    %810 = vmatprep.subr.bf16.mxu0 0
    %811 = vmatpush1.bf16.msra.mxu0 0
    %812 = vmatprep.subr.bf16.mxu0 0
    %813 = vmatpush1.bf16.msra.mxu0 0
    %814 = vmatprep.subr.bf16.mxu0 0
    %815 = vmatpush1.bf16.msra.mxu0 0
    %816 = vmatprep.subr.bf16.mxu0 0
    %817 = vmatpush1.bf16.msra.mxu0 0
    %818 = vmatprep.subr.bf16.mxu0 0
    %819 = vmatpush1.bf16.msra.mxu0 %v644
    %820 = vmatprep.subr.bf16.mxu0 0
    %821 = vmatpush1.bf16.msra.mxu0 %v643
    %822 = vmatprep.subr.bf16.mxu0 0
    %823 = vmatpush2.bf16.msra.mxu0 0
    %824 = vmatprep.subr.bf16.mxu0 0
    %825 = vmatpush2.bf16.msra.mxu0 0
    %826 = vmatprep.subr.bf16.mxu0 0
    %827 = vmatpush2.bf16.msra.mxu0 0
    %828 = vmatprep.subr.bf16.mxu0 0
    %829 = vmatpush2.bf16.msra.mxu0 0
    %830 = vmatprep.subr.bf16.mxu0 0
    %831 = vmatpush2.bf16.msra.mxu0 0
    %832 = vmatprep.subr.bf16.mxu0 0
    %833 = vmatpush2.bf16.msra.mxu0 0
    %834 = vmatprep.subr.bf16.mxu0 0
    %835 = vmatpush2.bf16.msra.mxu0 0
    %836 = vmatprep.subr.bf16.mxu0 0
    %837 = vmatpush2.bf16.msra.mxu0 0
    %838 = vmatprep.mubr.bf16.mxu0 0
    %839 = vmatmul.mubr.bf16.gmra.mxu0 %v757
    %v840 = vpop.f32.mrf.mxu0
    %v841 = vadd.f32 0.0, %v840
    %v842 = vpop.f32.mrf.mxu0
    %v843 = vpop.f32.mrf.mxu0
    %v844 = vpop.f32.mrf.mxu0
    %845 = vdwg.mxu0
    %v846 = vadd.f32 %v497, %v841
    %v847 = vxor.u32 %v846, 2147483648
    %v848 = vmul.f32 %v847, 1.442695
    %v849 = vpow.pop %v848
    %v850 = vadd.f32 %v849, 1.0
    %v851 = vrcp.pop %v850
    %v852 = vmul.f32 1.0, %v851
    %853 = vmatprep.subr.bf16.mxu0 0
    %854 = vmatpush1.bf16.msra.mxu0 0
    %855 = vmatprep.subr.bf16.mxu0 0
    %856 = vmatpush1.bf16.msra.mxu0 0
    %857 = vmatprep.subr.bf16.mxu0 0
    %858 = vmatpush1.bf16.msra.mxu0 0
    %859 = vmatprep.subr.bf16.mxu0 0
    %860 = vmatpush1.bf16.msra.mxu0 0
    %861 = vmatprep.subr.bf16.mxu0 0
    %862 = vmatpush1.bf16.msra.mxu0 0
    %863 = vmatprep.subr.bf16.mxu0 0
    %864 = vmatpush1.bf16.msra.mxu0 0
    %865 = vmatprep.subr.bf16.mxu0 0
    %866 = vmatpush1.bf16.msra.mxu0 %v703
    %867 = vmatprep.subr.bf16.mxu0 0
    %868 = vmatpush1.bf16.msra.mxu0 %v702
    %869 = vmatprep.subr.bf16.mxu0 0
    %870 = vmatpush2.bf16.msra.mxu0 0
    %871 = vmatprep.subr.bf16.mxu0 0
    %872 = vmatpush2.bf16.msra.mxu0 0
    %873 = vmatprep.subr.bf16.mxu0 0
    %874 = vmatpush2.bf16.msra.mxu0 0
    %875 = vmatprep.subr.bf16.mxu0 0
    %876 = vmatpush2.bf16.msra.mxu0 0
    %877 = vmatprep.subr.bf16.mxu0 0
    %878 = vmatpush2.bf16.msra.mxu0 0
    %879 = vmatprep.subr.bf16.mxu0 0
    %880 = vmatpush2.bf16.msra.mxu0 0
    %881 = vmatprep.subr.bf16.mxu0 0
    %882 = vmatpush2.bf16.msra.mxu0 0
    %883 = vmatprep.subr.bf16.mxu0 0
    %884 = vmatpush2.bf16.msra.mxu0 0
    %885 = vmatprep.mubr.bf16.mxu0 0
    %886 = vmatmul.mubr.bf16.gmra.mxu0 %v757
    %v887 = vpop.f32.mrf.mxu0
    %v888 = vadd.f32 %v559, %v887
    %v889 = vpop.f32.mrf.mxu0
    %v890 = vpop.f32.mrf.mxu0
    %v891 = vpop.f32.mrf.mxu0
    %892 = vdwg.mxu0
    %v893 = vmul.f32 %v805, %v888
    %v894 = vadd.f32 %v554, %v893
    %v895 = vtanh.pop %v894
    %v896 = vsub.f32 1.0, %v852
    %v897 = vmul.f32 %v896, %v895
    %v898 = vmul.f32 %v852, %v752
    %v899 = vadd.f32 %v897, %v898
    %900 = vst.msk [vmem:[#allocation2 + $0x1] sm:$0x1] %vm753, %v899
    %v901 = vpack.c.bf16 %v899, %v899
    %v903 = vsel %vm207, %v901, 0
    %905 = vmatprep.subr.bf16.mxu0 0
    %906 = vmatpush1.bf16.msra.mxu0 0
    %907 = vmatprep.subr.bf16.mxu0 0
    %908 = vmatpush1.bf16.msra.mxu0 0
    %909 = vmatprep.subr.bf16.mxu0 0
    %910 = vmatpush1.bf16.msra.mxu0 0
    %911 = vmatprep.subr.bf16.mxu0 0
    %912 = vmatpush1.bf16.msra.mxu0 0
    %913 = vmatprep.subr.bf16.mxu0 0
    %914 = vmatpush1.bf16.msra.mxu0 0
    %915 = vmatprep.subr.bf16.mxu0 0
    %916 = vmatpush1.bf16.msra.mxu0 0
    %917 = vmatprep.subr.bf16.mxu0 0
    %918 = vmatpush1.bf16.msra.mxu0 %v582
    %919 = vmatprep.subr.bf16.mxu0 0
    %920 = vmatpush1.bf16.msra.mxu0 %v581
    %921 = vmatprep.subr.bf16.mxu0 0
    %922 = vmatpush2.bf16.msra.mxu0 0
    %923 = vmatprep.subr.bf16.mxu0 0
    %924 = vmatpush2.bf16.msra.mxu0 0
    %925 = vmatprep.subr.bf16.mxu0 0
    %926 = vmatpush2.bf16.msra.mxu0 0
    %927 = vmatprep.subr.bf16.mxu0 0
    %928 = vmatpush2.bf16.msra.mxu0 0
    %929 = vmatprep.subr.bf16.mxu0 0
    %930 = vmatpush2.bf16.msra.mxu0 0
    %931 = vmatprep.subr.bf16.mxu0 0
    %932 = vmatpush2.bf16.msra.mxu0 0
    %933 = vmatprep.subr.bf16.mxu0 0
    %934 = vmatpush2.bf16.msra.mxu0 0
    %935 = vmatprep.subr.bf16.mxu0 0
    %936 = vmatpush2.bf16.msra.mxu0 0
    %937 = vmatprep.mubr.bf16.mxu0 0
    %938 = vmatmul.mubr.bf16.gmra.mxu0 %v903
    %v939 = vpop.f32.mrf.mxu0
    %v940 = vadd.f32 0.0, %v939
    %v941 = vpop.f32.mrf.mxu0
    %v942 = vpop.f32.mrf.mxu0
    %v943 = vpop.f32.mrf.mxu0
    %944 = vdwg.mxu0
    %v945 = vadd.f32 %v440, %v940
    %v946 = vxor.u32 %v945, 2147483648
    %v947 = vmul.f32 %v946, 1.442695
    %v948 = vpow.pop %v947
    %v949 = vadd.f32 %v948, 1.0
    %v950 = vrcp.pop %v949
    %v951 = vmul.f32 1.0, %v950
    %952 = vmatprep.subr.bf16.mxu0 0
    %953 = vmatpush1.bf16.msra.mxu0 0
    %954 = vmatprep.subr.bf16.mxu0 0
    %955 = vmatpush1.bf16.msra.mxu0 0
    %956 = vmatprep.subr.bf16.mxu0 0
    %957 = vmatpush1.bf16.msra.mxu0 0
    %958 = vmatprep.subr.bf16.mxu0 0
    %959 = vmatpush1.bf16.msra.mxu0 0
    %960 = vmatprep.subr.bf16.mxu0 0
    %961 = vmatpush1.bf16.msra.mxu0 0
    %962 = vmatprep.subr.bf16.mxu0 0
    %963 = vmatpush1.bf16.msra.mxu0 0
    %964 = vmatprep.subr.bf16.mxu0 0
    %965 = vmatpush1.bf16.msra.mxu0 %v644
    %966 = vmatprep.subr.bf16.mxu0 0
    %967 = vmatpush1.bf16.msra.mxu0 %v643
    %968 = vmatprep.subr.bf16.mxu0 0
    %969 = vmatpush2.bf16.msra.mxu0 0
    %970 = vmatprep.subr.bf16.mxu0 0
    %971 = vmatpush2.bf16.msra.mxu0 0
    %972 = vmatprep.subr.bf16.mxu0 0
    %973 = vmatpush2.bf16.msra.mxu0 0
    %974 = vmatprep.subr.bf16.mxu0 0
    %975 = vmatpush2.bf16.msra.mxu0 0
    %976 = vmatprep.subr.bf16.mxu0 0
    %977 = vmatpush2.bf16.msra.mxu0 0
    %978 = vmatprep.subr.bf16.mxu0 0
    %979 = vmatpush2.bf16.msra.mxu0 0
    %980 = vmatprep.subr.bf16.mxu0 0
    %981 = vmatpush2.bf16.msra.mxu0 0
    %982 = vmatprep.subr.bf16.mxu0 0
    %983 = vmatpush2.bf16.msra.mxu0 0
    %984 = vmatprep.mubr.bf16.mxu0 0
    %985 = vmatmul.mubr.bf16.gmra.mxu0 %v903
    %v986 = vpop.f32.mrf.mxu0
    %v987 = vadd.f32 0.0, %v986
    %v988 = vpop.f32.mrf.mxu0
    %v989 = vpop.f32.mrf.mxu0
    %v990 = vpop.f32.mrf.mxu0
    %991 = vdwg.mxu0
    %v992 = vadd.f32 %v497, %v987
    %v993 = vxor.u32 %v992, 2147483648
    %v994 = vmul.f32 %v993, 1.442695
    %v995 = vpow.pop %v994
    %v996 = vadd.f32 %v995, 1.0
    %v997 = vrcp.pop %v996
    %v998 = vmul.f32 1.0, %v997
    %999 = vmatprep.subr.bf16.mxu0 0
    %1000 = vmatpush1.bf16.msra.mxu0 0
    %1001 = vmatprep.subr.bf16.mxu0 0
    %1002 = vmatpush1.bf16.msra.mxu0 0
    %1003 = vmatprep.subr.bf16.mxu0 0
    %1004 = vmatpush1.bf16.msra.mxu0 0
    %1005 = vmatprep.subr.bf16.mxu0 0
    %1006 = vmatpush1.bf16.msra.mxu0 0
    %1007 = vmatprep.subr.bf16.mxu0 0
    %1008 = vmatpush1.bf16.msra.mxu0 0
    %1009 = vmatprep.subr.bf16.mxu0 0
    %1010 = vmatpush1.bf16.msra.mxu0 0
    %1011 = vmatprep.subr.bf16.mxu0 0
    %1012 = vmatpush1.bf16.msra.mxu0 %v703
    %1013 = vmatprep.subr.bf16.mxu0 0
    %1014 = vmatpush1.bf16.msra.mxu0 %v702
    %1015 = vmatprep.subr.bf16.mxu0 0
    %1016 = vmatpush2.bf16.msra.mxu0 0
    %1017 = vmatprep.subr.bf16.mxu0 0
    %1018 = vmatpush2.bf16.msra.mxu0 0
    %1019 = vmatprep.subr.bf16.mxu0 0
    %1020 = vmatpush2.bf16.msra.mxu0 0
    %1021 = vmatprep.subr.bf16.mxu0 0
    %1022 = vmatpush2.bf16.msra.mxu0 0
    %1023 = vmatprep.subr.bf16.mxu0 0
    %1024 = vmatpush2.bf16.msra.mxu0 0
    %1025 = vmatprep.subr.bf16.mxu0 0
    %1026 = vmatpush2.bf16.msra.mxu0 0
    %1027 = vmatprep.subr.bf16.mxu0 0
    %1028 = vmatpush2.bf16.msra.mxu0 0
    %1029 = vmatprep.subr.bf16.mxu0 0
    %1030 = vmatpush2.bf16.msra.mxu0 0
    %1031 = vmatprep.mubr.bf16.mxu0 0
    %1032 = vmatmul.mubr.bf16.gmra.mxu0 %v903
    %v1033 = vpop.f32.mrf.mxu0
    %v1034 = vadd.f32 %v559, %v1033
    %v1035 = vpop.f32.mrf.mxu0
    %v1036 = vpop.f32.mrf.mxu0
    %v1037 = vpop.f32.mrf.mxu0
    %1038 = vdwg.mxu0
    %v1039 = vmul.f32 %v951, %v1034
    %v1040 = vadd.f32 %v554, %v1039
    %v1041 = vtanh.pop %v1040
    %v1042 = vsub.f32 1.0, %v998
    %v1043 = vmul.f32 %v1042, %v1041
    %v1044 = vmul.f32 %v998, %v899
    %v1045 = vadd.f32 %v1043, %v1044
    %1046 = vst.msk [vmem:[#allocation2 + $0x2] sm:$0x1] %vm753, %v1045
    %v1047 = vpack.c.bf16 %v1045, %v1045
    %v1049 = vsel %vm207, %v1047, 0
    %1051 = vmatprep.subr.bf16.mxu0 0
    %1052 = vmatpush1.bf16.msra.mxu0 0
    %1053 = vmatprep.subr.bf16.mxu0 0
    %1054 = vmatpush1.bf16.msra.mxu0 0
    %1055 = vmatprep.subr.bf16.mxu0 0
    %1056 = vmatpush1.bf16.msra.mxu0 0
    %1057 = vmatprep.subr.bf16.mxu0 0
    %1058 = vmatpush1.bf16.msra.mxu0 0
    %1059 = vmatprep.subr.bf16.mxu0 0
    %1060 = vmatpush1.bf16.msra.mxu0 0
    %1061 = vmatprep.subr.bf16.mxu0 0
    %1062 = vmatpush1.bf16.msra.mxu0 0
    %1063 = vmatprep.subr.bf16.mxu0 0
    %1064 = vmatpush1.bf16.msra.mxu0 %v582
    %1065 = vmatprep.subr.bf16.mxu0 0
    %1066 = vmatpush1.bf16.msra.mxu0 %v581
    %1067 = vmatprep.subr.bf16.mxu0 0
    %1068 = vmatpush2.bf16.msra.mxu0 0
    %1069 = vmatprep.subr.bf16.mxu0 0
    %1070 = vmatpush2.bf16.msra.mxu0 0
    %1071 = vmatprep.subr.bf16.mxu0 0
    %1072 = vmatpush2.bf16.msra.mxu0 0
    %1073 = vmatprep.subr.bf16.mxu0 0
    %1074 = vmatpush2.bf16.msra.mxu0 0
    %1075 = vmatprep.subr.bf16.mxu0 0
    %1076 = vmatpush2.bf16.msra.mxu0 0
    %1077 = vmatprep.subr.bf16.mxu0 0
    %1078 = vmatpush2.bf16.msra.mxu0 0
    %1079 = vmatprep.subr.bf16.mxu0 0
    %1080 = vmatpush2.bf16.msra.mxu0 0
    %1081 = vmatprep.subr.bf16.mxu0 0
    %1082 = vmatpush2.bf16.msra.mxu0 0
    %1083 = vmatprep.mubr.bf16.mxu0 0
    %1084 = vmatmul.mubr.bf16.gmra.mxu0 %v1049
    %v1085 = vpop.f32.mrf.mxu0
    %v1086 = vadd.f32 0.0, %v1085
    %v1087 = vpop.f32.mrf.mxu0
    %v1088 = vpop.f32.mrf.mxu0
    %v1089 = vpop.f32.mrf.mxu0
    %1090 = vdwg.mxu0
    %v1091 = vadd.f32 %v440, %v1086
    %v1092 = vxor.u32 %v1091, 2147483648
    %v1093 = vmul.f32 %v1092, 1.442695
    %v1094 = vpow.pop %v1093
    %v1095 = vadd.f32 %v1094, 1.0
    %v1096 = vrcp.pop %v1095
    %v1097 = vmul.f32 1.0, %v1096
    %1098 = vmatprep.subr.bf16.mxu0 0
    %1099 = vmatpush1.bf16.msra.mxu0 0
    %1100 = vmatprep.subr.bf16.mxu0 0
    %1101 = vmatpush1.bf16.msra.mxu0 0
    %1102 = vmatprep.subr.bf16.mxu0 0
    %1103 = vmatpush1.bf16.msra.mxu0 0
    %1104 = vmatprep.subr.bf16.mxu0 0
    %1105 = vmatpush1.bf16.msra.mxu0 0
    %1106 = vmatprep.subr.bf16.mxu0 0
    %1107 = vmatpush1.bf16.msra.mxu0 0
    %1108 = vmatprep.subr.bf16.mxu0 0
    %1109 = vmatpush1.bf16.msra.mxu0 0
    %1110 = vmatprep.subr.bf16.mxu0 0
    %1111 = vmatpush1.bf16.msra.mxu0 %v644
    %1112 = vmatprep.subr.bf16.mxu0 0
    %1113 = vmatpush1.bf16.msra.mxu0 %v643
    %1114 = vmatprep.subr.bf16.mxu0 0
    %1115 = vmatpush2.bf16.msra.mxu0 0
    %1116 = vmatprep.subr.bf16.mxu0 0
    %1117 = vmatpush2.bf16.msra.mxu0 0
    %1118 = vmatprep.subr.bf16.mxu0 0
    %1119 = vmatpush2.bf16.msra.mxu0 0
    %1120 = vmatprep.subr.bf16.mxu0 0
    %1121 = vmatpush2.bf16.msra.mxu0 0
    %1122 = vmatprep.subr.bf16.mxu0 0
    %1123 = vmatpush2.bf16.msra.mxu0 0
    %1124 = vmatprep.subr.bf16.mxu0 0
    %1125 = vmatpush2.bf16.msra.mxu0 0
    %1126 = vmatprep.subr.bf16.mxu0 0
    %1127 = vmatpush2.bf16.msra.mxu0 0
    %1128 = vmatprep.subr.bf16.mxu0 0
    %1129 = vmatpush2.bf16.msra.mxu0 0
    %1130 = vmatprep.mubr.bf16.mxu0 0
    %1131 = vmatmul.mubr.bf16.gmra.mxu0 %v1049
    %v1132 = vpop.f32.mrf.mxu0
    %v1133 = vadd.f32 0.0, %v1132
    %v1134 = vpop.f32.mrf.mxu0
    %v1135 = vpop.f32.mrf.mxu0
    %v1136 = vpop.f32.mrf.mxu0
    %1137 = vdwg.mxu0
    %v1138 = vadd.f32 %v497, %v1133
    %v1139 = vxor.u32 %v1138, 2147483648
    %v1140 = vmul.f32 %v1139, 1.442695
    %v1141 = vpow.pop %v1140
    %v1142 = vadd.f32 %v1141, 1.0
    %v1143 = vrcp.pop %v1142
    %v1144 = vmul.f32 1.0, %v1143
    %1145 = vmatprep.subr.bf16.mxu0 0
    %1146 = vmatpush1.bf16.msra.mxu0 0
    %1147 = vmatprep.subr.bf16.mxu0 0
    %1148 = vmatpush1.bf16.msra.mxu0 0
    %1149 = vmatprep.subr.bf16.mxu0 0
    %1150 = vmatpush1.bf16.msra.mxu0 0
    %1151 = vmatprep.subr.bf16.mxu0 0
    %1152 = vmatpush1.bf16.msra.mxu0 0
    %1153 = vmatprep.subr.bf16.mxu0 0
    %1154 = vmatpush1.bf16.msra.mxu0 0
    %1155 = vmatprep.subr.bf16.mxu0 0
    %1156 = vmatpush1.bf16.msra.mxu0 0
    %1157 = vmatprep.subr.bf16.mxu0 0
    %1158 = vmatpush1.bf16.msra.mxu0 %v703
    %1159 = vmatprep.subr.bf16.mxu0 0
    %1160 = vmatpush1.bf16.msra.mxu0 %v702
    %1161 = vmatprep.subr.bf16.mxu0 0
    %1162 = vmatpush2.bf16.msra.mxu0 0
    %1163 = vmatprep.subr.bf16.mxu0 0
    %1164 = vmatpush2.bf16.msra.mxu0 0
    %1165 = vmatprep.subr.bf16.mxu0 0
    %1166 = vmatpush2.bf16.msra.mxu0 0
    %1167 = vmatprep.subr.bf16.mxu0 0
    %1168 = vmatpush2.bf16.msra.mxu0 0
    %1169 = vmatprep.subr.bf16.mxu0 0
    %1170 = vmatpush2.bf16.msra.mxu0 0
    %1171 = vmatprep.subr.bf16.mxu0 0
    %1172 = vmatpush2.bf16.msra.mxu0 0
    %1173 = vmatprep.subr.bf16.mxu0 0
    %1174 = vmatpush2.bf16.msra.mxu0 0
    %1175 = vmatprep.subr.bf16.mxu0 0
    %1176 = vmatpush2.bf16.msra.mxu0 0
    %1177 = vmatprep.mubr.bf16.mxu0 0
    %1178 = vmatmul.mubr.bf16.gmra.mxu0 %v1049
    %v1179 = vpop.f32.mrf.mxu0
    %v1180 = vadd.f32 %v559, %v1179
    %v1181 = vpop.f32.mrf.mxu0
    %v1182 = vpop.f32.mrf.mxu0
    %v1183 = vpop.f32.mrf.mxu0
    %1184 = vdwg.mxu0
    %v1185 = vmul.f32 %v1097, %v1180
    %v1186 = vadd.f32 %v554, %v1185
    %v1187 = vtanh.pop %v1186
    %v1188 = vsub.f32 1.0, %v1144
    %v1189 = vmul.f32 %v1188, %v1187
    %v1190 = vmul.f32 %v1144, %v1045
    %v1191 = vadd.f32 %v1189, %v1190
    %1192 = vst.msk [vmem:[#allocation2 + $0x3] sm:$0x1] %vm753, %v1191
    %v1193 = vpack.c.bf16 %v1191, %v1191
    %v1195 = vsel %vm207, %v1193, 0
    %1197 = vmatprep.subr.bf16.mxu0 0
    %1198 = vmatpush1.bf16.msra.mxu0 0
    %1199 = vmatprep.subr.bf16.mxu0 0
    %1200 = vmatpush1.bf16.msra.mxu0 0
    %1201 = vmatprep.subr.bf16.mxu0 0
    %1202 = vmatpush1.bf16.msra.mxu0 0
    %1203 = vmatprep.subr.bf16.mxu0 0
    %1204 = vmatpush1.bf16.msra.mxu0 0
    %1205 = vmatprep.subr.bf16.mxu0 0
    %1206 = vmatpush1.bf16.msra.mxu0 0
    %1207 = vmatprep.subr.bf16.mxu0 0
    %1208 = vmatpush1.bf16.msra.mxu0 0
    %1209 = vmatprep.subr.bf16.mxu0 0
    %1210 = vmatpush1.bf16.msra.mxu0 %v582
    %1211 = vmatprep.subr.bf16.mxu0 0
    %1212 = vmatpush1.bf16.msra.mxu0 %v581
    %1213 = vmatprep.subr.bf16.mxu0 0
    %1214 = vmatpush2.bf16.msra.mxu0 0
    %1215 = vmatprep.subr.bf16.mxu0 0
    %1216 = vmatpush2.bf16.msra.mxu0 0
    %1217 = vmatprep.subr.bf16.mxu0 0
    %1218 = vmatpush2.bf16.msra.mxu0 0
    %1219 = vmatprep.subr.bf16.mxu0 0
    %1220 = vmatpush2.bf16.msra.mxu0 0
    %1221 = vmatprep.subr.bf16.mxu0 0
    %1222 = vmatpush2.bf16.msra.mxu0 0
    %1223 = vmatprep.subr.bf16.mxu0 0
    %1224 = vmatpush2.bf16.msra.mxu0 0
    %1225 = vmatprep.subr.bf16.mxu0 0
    %1226 = vmatpush2.bf16.msra.mxu0 0
    %1227 = vmatprep.subr.bf16.mxu0 0
    %1228 = vmatpush2.bf16.msra.mxu0 0
    %1229 = vmatprep.mubr.bf16.mxu0 0
    %1230 = vmatmul.mubr.bf16.gmra.mxu0 %v1195
    %v1231 = vpop.f32.mrf.mxu0
    %v1232 = vadd.f32 0.0, %v1231
    %v1233 = vpop.f32.mrf.mxu0
    %v1234 = vpop.f32.mrf.mxu0
    %v1235 = vpop.f32.mrf.mxu0
    %1236 = vdwg.mxu0
    %v1237 = vadd.f32 %v440, %v1232
    %v1238 = vxor.u32 %v1237, 2147483648
    %v1239 = vmul.f32 %v1238, 1.442695
    %v1240 = vpow.pop %v1239
    %v1241 = vadd.f32 %v1240, 1.0
    %v1242 = vrcp.pop %v1241
    %v1243 = vmul.f32 1.0, %v1242
    %1244 = vmatprep.subr.bf16.mxu0 0
    %1245 = vmatpush1.bf16.msra.mxu0 0
    %1246 = vmatprep.subr.bf16.mxu0 0
    %1247 = vmatpush1.bf16.msra.mxu0 0
    %1248 = vmatprep.subr.bf16.mxu0 0
    %1249 = vmatpush1.bf16.msra.mxu0 0
    %1250 = vmatprep.subr.bf16.mxu0 0
    %1251 = vmatpush1.bf16.msra.mxu0 0
    %1252 = vmatprep.subr.bf16.mxu0 0
    %1253 = vmatpush1.bf16.msra.mxu0 0
    %1254 = vmatprep.subr.bf16.mxu0 0
    %1255 = vmatpush1.bf16.msra.mxu0 0
    %1256 = vmatprep.subr.bf16.mxu0 0
    %1257 = vmatpush1.bf16.msra.mxu0 %v644
    %1258 = vmatprep.subr.bf16.mxu0 0
    %1259 = vmatpush1.bf16.msra.mxu0 %v643
    %1260 = vmatprep.subr.bf16.mxu0 0
    %1261 = vmatpush2.bf16.msra.mxu0 0
    %1262 = vmatprep.subr.bf16.mxu0 0
    %1263 = vmatpush2.bf16.msra.mxu0 0
    %1264 = vmatprep.subr.bf16.mxu0 0
    %1265 = vmatpush2.bf16.msra.mxu0 0
    %1266 = vmatprep.subr.bf16.mxu0 0
    %1267 = vmatpush2.bf16.msra.mxu0 0
    %1268 = vmatprep.subr.bf16.mxu0 0
    %1269 = vmatpush2.bf16.msra.mxu0 0
    %1270 = vmatprep.subr.bf16.mxu0 0
    %1271 = vmatpush2.bf16.msra.mxu0 0
    %1272 = vmatprep.subr.bf16.mxu0 0
    %1273 = vmatpush2.bf16.msra.mxu0 0
    %1274 = vmatprep.subr.bf16.mxu0 0
    %1275 = vmatpush2.bf16.msra.mxu0 0
    %1276 = vmatprep.mubr.bf16.mxu0 0
    %1277 = vmatmul.mubr.bf16.gmra.mxu0 %v1195
    %v1278 = vpop.f32.mrf.mxu0
    %v1279 = vadd.f32 0.0, %v1278
    %v1280 = vpop.f32.mrf.mxu0
    %v1281 = vpop.f32.mrf.mxu0
    %v1282 = vpop.f32.mrf.mxu0
    %1283 = vdwg.mxu0
    %v1284 = vadd.f32 %v497, %v1279
    %v1285 = vxor.u32 %v1284, 2147483648
    %v1286 = vmul.f32 %v1285, 1.442695
    %v1287 = vpow.pop %v1286
    %v1288 = vadd.f32 %v1287, 1.0
    %v1289 = vrcp.pop %v1288
    %v1290 = vmul.f32 1.0, %v1289
    %1291 = vmatprep.subr.bf16.mxu0 0
    %1292 = vmatpush1.bf16.msra.mxu0 0
    %1293 = vmatprep.subr.bf16.mxu0 0
    %1294 = vmatpush1.bf16.msra.mxu0 0
    %1295 = vmatprep.subr.bf16.mxu0 0
    %1296 = vmatpush1.bf16.msra.mxu0 0
    %1297 = vmatprep.subr.bf16.mxu0 0
    %1298 = vmatpush1.bf16.msra.mxu0 0
    %1299 = vmatprep.subr.bf16.mxu0 0
    %1300 = vmatpush1.bf16.msra.mxu0 0
    %1301 = vmatprep.subr.bf16.mxu0 0
    %1302 = vmatpush1.bf16.msra.mxu0 0
    %1303 = vmatprep.subr.bf16.mxu0 0
    %1304 = vmatpush1.bf16.msra.mxu0 %v703
    %1305 = vmatprep.subr.bf16.mxu0 0
    %1306 = vmatpush1.bf16.msra.mxu0 %v702
    %1307 = vmatprep.subr.bf16.mxu0 0
    %1308 = vmatpush2.bf16.msra.mxu0 0
    %1309 = vmatprep.subr.bf16.mxu0 0
    %1310 = vmatpush2.bf16.msra.mxu0 0
    %1311 = vmatprep.subr.bf16.mxu0 0
    %1312 = vmatpush2.bf16.msra.mxu0 0
    %1313 = vmatprep.subr.bf16.mxu0 0
    %1314 = vmatpush2.bf16.msra.mxu0 0
    %1315 = vmatprep.subr.bf16.mxu0 0
    %1316 = vmatpush2.bf16.msra.mxu0 0
    %1317 = vmatprep.subr.bf16.mxu0 0
    %1318 = vmatpush2.bf16.msra.mxu0 0
    %1319 = vmatprep.subr.bf16.mxu0 0
    %1320 = vmatpush2.bf16.msra.mxu0 0
    %1321 = vmatprep.subr.bf16.mxu0 0
    %1322 = vmatpush2.bf16.msra.mxu0 0
    %1323 = vmatprep.mubr.bf16.mxu0 0
    %1324 = vmatmul.mubr.bf16.gmra.mxu0 %v1195
    %v1325 = vpop.f32.mrf.mxu0
    %v1326 = vadd.f32 %v559, %v1325
    %v1327 = vpop.f32.mrf.mxu0
    %v1328 = vpop.f32.mrf.mxu0
    %v1329 = vpop.f32.mrf.mxu0
    %1330 = vdwg.mxu0
    %v1331 = vmul.f32 %v1243, %v1326
    %v1332 = vadd.f32 %v554, %v1331
    %v1333 = vtanh.pop %v1332
    %v1334 = vsub.f32 1.0, %v1290
    %v1335 = vmul.f32 %v1334, %v1333
    %v1336 = vmul.f32 %v1290, %v1191
    %v1337 = vadd.f32 %v1335, %v1336
    %1338 = vst.msk [vmem:[#allocation2 + $0x4] sm:$0x1] %vm753, %v1337
    %v1339 = vpack.c.bf16 %v1337, %v1337
    %v1341 = vsel %vm207, %v1339, 0
    %1343 = vmatprep.subr.bf16.mxu0 0
    %1344 = vmatpush1.bf16.msra.mxu0 0
    %1345 = vmatprep.subr.bf16.mxu0 0
    %1346 = vmatpush1.bf16.msra.mxu0 0
    %1347 = vmatprep.subr.bf16.mxu0 0
    %1348 = vmatpush1.bf16.msra.mxu0 0
    %1349 = vmatprep.subr.bf16.mxu0 0
    %1350 = vmatpush1.bf16.msra.mxu0 0
    %1351 = vmatprep.subr.bf16.mxu0 0
    %1352 = vmatpush1.bf16.msra.mxu0 0
    %1353 = vmatprep.subr.bf16.mxu0 0
    %1354 = vmatpush1.bf16.msra.mxu0 0
    %1355 = vmatprep.subr.bf16.mxu0 0
    %1356 = vmatpush1.bf16.msra.mxu0 %v582
    %1357 = vmatprep.subr.bf16.mxu0 0
    %1358 = vmatpush1.bf16.msra.mxu0 %v581
    %1359 = vmatprep.subr.bf16.mxu0 0
    %1360 = vmatpush2.bf16.msra.mxu0 0
    %1361 = vmatprep.subr.bf16.mxu0 0
    %1362 = vmatpush2.bf16.msra.mxu0 0
    %1363 = vmatprep.subr.bf16.mxu0 0
    %1364 = vmatpush2.bf16.msra.mxu0 0
    %1365 = vmatprep.subr.bf16.mxu0 0
    %1366 = vmatpush2.bf16.msra.mxu0 0
    %1367 = vmatprep.subr.bf16.mxu0 0
    %1368 = vmatpush2.bf16.msra.mxu0 0
    %1369 = vmatprep.subr.bf16.mxu0 0
    %1370 = vmatpush2.bf16.msra.mxu0 0
    %1371 = vmatprep.subr.bf16.mxu0 0
    %1372 = vmatpush2.bf16.msra.mxu0 0
    %1373 = vmatprep.subr.bf16.mxu0 0
    %1374 = vmatpush2.bf16.msra.mxu0 0
    %1375 = vmatprep.mubr.bf16.mxu0 0
    %1376 = vmatmul.mubr.bf16.gmra.mxu0 %v1341
    %v1377 = vpop.f32.mrf.mxu0
    %v1378 = vadd.f32 0.0, %v1377
    %v1379 = vpop.f32.mrf.mxu0
    %v1380 = vpop.f32.mrf.mxu0
    %v1381 = vpop.f32.mrf.mxu0
    %1382 = vdwg.mxu0
    %v1383 = vadd.f32 %v440, %v1378
    %v1384 = vxor.u32 %v1383, 2147483648
    %v1385 = vmul.f32 %v1384, 1.442695
    %v1386 = vpow.pop %v1385
    %v1387 = vadd.f32 %v1386, 1.0
    %v1388 = vrcp.pop %v1387
    %v1389 = vmul.f32 1.0, %v1388
    %1390 = vmatprep.subr.bf16.mxu0 0
    %1391 = vmatpush1.bf16.msra.mxu0 0
    %1392 = vmatprep.subr.bf16.mxu0 0
    %1393 = vmatpush1.bf16.msra.mxu0 0
    %1394 = vmatprep.subr.bf16.mxu0 0
    %1395 = vmatpush1.bf16.msra.mxu0 0
    %1396 = vmatprep.subr.bf16.mxu0 0
    %1397 = vmatpush1.bf16.msra.mxu0 0
    %1398 = vmatprep.subr.bf16.mxu0 0
    %1399 = vmatpush1.bf16.msra.mxu0 0
    %1400 = vmatprep.subr.bf16.mxu0 0
    %1401 = vmatpush1.bf16.msra.mxu0 0
    %1402 = vmatprep.subr.bf16.mxu0 0
    %1403 = vmatpush1.bf16.msra.mxu0 %v644
    %1404 = vmatprep.subr.bf16.mxu0 0
    %1405 = vmatpush1.bf16.msra.mxu0 %v643
    %1406 = vmatprep.subr.bf16.mxu0 0
    %1407 = vmatpush2.bf16.msra.mxu0 0
    %1408 = vmatprep.subr.bf16.mxu0 0
    %1409 = vmatpush2.bf16.msra.mxu0 0
    %1410 = vmatprep.subr.bf16.mxu0 0
    %1411 = vmatpush2.bf16.msra.mxu0 0
    %1412 = vmatprep.subr.bf16.mxu0 0
    %1413 = vmatpush2.bf16.msra.mxu0 0
    %1414 = vmatprep.subr.bf16.mxu0 0
    %1415 = vmatpush2.bf16.msra.mxu0 0
    %1416 = vmatprep.subr.bf16.mxu0 0
    %1417 = vmatpush2.bf16.msra.mxu0 0
    %1418 = vmatprep.subr.bf16.mxu0 0
    %1419 = vmatpush2.bf16.msra.mxu0 0
    %1420 = vmatprep.subr.bf16.mxu0 0
    %1421 = vmatpush2.bf16.msra.mxu0 0
    %1422 = vmatprep.mubr.bf16.mxu0 0
    %1423 = vmatmul.mubr.bf16.gmra.mxu0 %v1341
    %v1424 = vpop.f32.mrf.mxu0
    %v1425 = vadd.f32 0.0, %v1424
    %v1426 = vpop.f32.mrf.mxu0
    %v1427 = vpop.f32.mrf.mxu0
    %v1428 = vpop.f32.mrf.mxu0
    %1429 = vdwg.mxu0
    %v1430 = vadd.f32 %v497, %v1425
    %v1431 = vxor.u32 %v1430, 2147483648
    %v1432 = vmul.f32 %v1431, 1.442695
    %v1433 = vpow.pop %v1432
    %v1434 = vadd.f32 %v1433, 1.0
    %v1435 = vrcp.pop %v1434
    %v1436 = vmul.f32 1.0, %v1435
    %1437 = vmatprep.subr.bf16.mxu0 0
    %1438 = vmatpush1.bf16.msra.mxu0 0
    %1439 = vmatprep.subr.bf16.mxu0 0
    %1440 = vmatpush1.bf16.msra.mxu0 0
    %1441 = vmatprep.subr.bf16.mxu0 0
    %1442 = vmatpush1.bf16.msra.mxu0 0
    %1443 = vmatprep.subr.bf16.mxu0 0
    %1444 = vmatpush1.bf16.msra.mxu0 0
    %1445 = vmatprep.subr.bf16.mxu0 0
    %1446 = vmatpush1.bf16.msra.mxu0 0
    %1447 = vmatprep.subr.bf16.mxu0 0
    %1448 = vmatpush1.bf16.msra.mxu0 0
    %1449 = vmatprep.subr.bf16.mxu0 0
    %1450 = vmatpush1.bf16.msra.mxu0 %v703
    %1451 = vmatprep.subr.bf16.mxu0 0
    %1452 = vmatpush1.bf16.msra.mxu0 %v702
    %1453 = vmatprep.subr.bf16.mxu0 0
    %1454 = vmatpush2.bf16.msra.mxu0 0
    %1455 = vmatprep.subr.bf16.mxu0 0
    %1456 = vmatpush2.bf16.msra.mxu0 0
    %1457 = vmatprep.subr.bf16.mxu0 0
    %1458 = vmatpush2.bf16.msra.mxu0 0
    %1459 = vmatprep.subr.bf16.mxu0 0
    %1460 = vmatpush2.bf16.msra.mxu0 0
    %1461 = vmatprep.subr.bf16.mxu0 0
    %1462 = vmatpush2.bf16.msra.mxu0 0
    %1463 = vmatprep.subr.bf16.mxu0 0
    %1464 = vmatpush2.bf16.msra.mxu0 0
    %1465 = vmatprep.subr.bf16.mxu0 0
    %1466 = vmatpush2.bf16.msra.mxu0 0
    %1467 = vmatprep.subr.bf16.mxu0 0
    %1468 = vmatpush2.bf16.msra.mxu0 0
    %1469 = vmatprep.mubr.bf16.mxu0 0
    %1470 = vmatmul.mubr.bf16.gmra.mxu0 %v1341
    %v1471 = vpop.f32.mrf.mxu0
    %v1472 = vadd.f32 %v559, %v1471
    %v1473 = vpop.f32.mrf.mxu0
    %v1474 = vpop.f32.mrf.mxu0
    %v1475 = vpop.f32.mrf.mxu0
    %1476 = vdwg.mxu0
    %v1477 = vmul.f32 %v1389, %v1472
    %v1478 = vadd.f32 %v554, %v1477
    %v1479 = vtanh.pop %v1478
    %v1480 = vsub.f32 1.0, %v1436
    %v1481 = vmul.f32 %v1480, %v1479
    %v1482 = vmul.f32 %v1436, %v1337
    %v1483 = vadd.f32 %v1481, %v1482
    %1484 = vst.msk [vmem:[#allocation2 + $0x5] sm:$0x1] %vm753, %v1483
    %v1485 = vpack.c.bf16 %v1483, %v1483
    %v1487 = vsel %vm207, %v1485, 0
    %1489 = vmatprep.subr.bf16.mxu0 0
    %1490 = vmatpush1.bf16.msra.mxu0 0
    %1491 = vmatprep.subr.bf16.mxu0 0
    %1492 = vmatpush1.bf16.msra.mxu0 0
    %1493 = vmatprep.subr.bf16.mxu0 0
    %1494 = vmatpush1.bf16.msra.mxu0 0
    %1495 = vmatprep.subr.bf16.mxu0 0
    %1496 = vmatpush1.bf16.msra.mxu0 0
    %1497 = vmatprep.subr.bf16.mxu0 0
    %1498 = vmatpush1.bf16.msra.mxu0 0
    %1499 = vmatprep.subr.bf16.mxu0 0
    %1500 = vmatpush1.bf16.msra.mxu0 0
    %1501 = vmatprep.subr.bf16.mxu0 0
    %1502 = vmatpush1.bf16.msra.mxu0 %v582
    %1503 = vmatprep.subr.bf16.mxu0 0
    %1504 = vmatpush1.bf16.msra.mxu0 %v581
    %1505 = vmatprep.subr.bf16.mxu0 0
    %1506 = vmatpush2.bf16.msra.mxu0 0
    %1507 = vmatprep.subr.bf16.mxu0 0
    %1508 = vmatpush2.bf16.msra.mxu0 0
    %1509 = vmatprep.subr.bf16.mxu0 0
    %1510 = vmatpush2.bf16.msra.mxu0 0
    %1511 = vmatprep.subr.bf16.mxu0 0
    %1512 = vmatpush2.bf16.msra.mxu0 0
    %1513 = vmatprep.subr.bf16.mxu0 0
    %1514 = vmatpush2.bf16.msra.mxu0 0
    %1515 = vmatprep.subr.bf16.mxu0 0
    %1516 = vmatpush2.bf16.msra.mxu0 0
    %1517 = vmatprep.subr.bf16.mxu0 0
    %1518 = vmatpush2.bf16.msra.mxu0 0
    %1519 = vmatprep.subr.bf16.mxu0 0
    %1520 = vmatpush2.bf16.msra.mxu0 0
    %1521 = vmatprep.mubr.bf16.mxu0 0
    %1522 = vmatmul.mubr.bf16.gmra.mxu0 %v1487
    %v1523 = vpop.f32.mrf.mxu0
    %v1524 = vadd.f32 0.0, %v1523
    %v1525 = vpop.f32.mrf.mxu0
    %v1526 = vpop.f32.mrf.mxu0
    %v1527 = vpop.f32.mrf.mxu0
    %1528 = vdwg.mxu0
    %v1529 = vadd.f32 %v440, %v1524
    %v1530 = vxor.u32 %v1529, 2147483648
    %v1531 = vmul.f32 %v1530, 1.442695
    %v1532 = vpow.pop %v1531
    %v1533 = vadd.f32 %v1532, 1.0
    %v1534 = vrcp.pop %v1533
    %v1535 = vmul.f32 1.0, %v1534
    %1536 = vmatprep.subr.bf16.mxu0 0
    %1537 = vmatpush1.bf16.msra.mxu0 0
    %1538 = vmatprep.subr.bf16.mxu0 0
    %1539 = vmatpush1.bf16.msra.mxu0 0
    %1540 = vmatprep.subr.bf16.mxu0 0
    %1541 = vmatpush1.bf16.msra.mxu0 0
    %1542 = vmatprep.subr.bf16.mxu0 0
    %1543 = vmatpush1.bf16.msra.mxu0 0
    %1544 = vmatprep.subr.bf16.mxu0 0
    %1545 = vmatpush1.bf16.msra.mxu0 0
    %1546 = vmatprep.subr.bf16.mxu0 0
    %1547 = vmatpush1.bf16.msra.mxu0 0
    %1548 = vmatprep.subr.bf16.mxu0 0
    %1549 = vmatpush1.bf16.msra.mxu0 %v644
    %1550 = vmatprep.subr.bf16.mxu0 0
    %1551 = vmatpush1.bf16.msra.mxu0 %v643
    %1552 = vmatprep.subr.bf16.mxu0 0
    %1553 = vmatpush2.bf16.msra.mxu0 0
    %1554 = vmatprep.subr.bf16.mxu0 0
    %1555 = vmatpush2.bf16.msra.mxu0 0
    %1556 = vmatprep.subr.bf16.mxu0 0
    %1557 = vmatpush2.bf16.msra.mxu0 0
    %1558 = vmatprep.subr.bf16.mxu0 0
    %1559 = vmatpush2.bf16.msra.mxu0 0
    %1560 = vmatprep.subr.bf16.mxu0 0
    %1561 = vmatpush2.bf16.msra.mxu0 0
    %1562 = vmatprep.subr.bf16.mxu0 0
    %1563 = vmatpush2.bf16.msra.mxu0 0
    %1564 = vmatprep.subr.bf16.mxu0 0
    %1565 = vmatpush2.bf16.msra.mxu0 0
    %1566 = vmatprep.subr.bf16.mxu0 0
    %1567 = vmatpush2.bf16.msra.mxu0 0
    %1568 = vmatprep.mubr.bf16.mxu0 0
    %1569 = vmatmul.mubr.bf16.gmra.mxu0 %v1487
    %v1570 = vpop.f32.mrf.mxu0
    %v1571 = vadd.f32 0.0, %v1570
    %v1572 = vpop.f32.mrf.mxu0
    %v1573 = vpop.f32.mrf.mxu0
    %v1574 = vpop.f32.mrf.mxu0
    %1575 = vdwg.mxu0
    %v1576 = vadd.f32 %v497, %v1571
    %v1577 = vxor.u32 %v1576, 2147483648
    %v1578 = vmul.f32 %v1577, 1.442695
    %v1579 = vpow.pop %v1578
    %v1580 = vadd.f32 %v1579, 1.0
    %v1581 = vrcp.pop %v1580
    %v1582 = vmul.f32 1.0, %v1581
    %1583 = vmatprep.subr.bf16.mxu0 0
    %1584 = vmatpush1.bf16.msra.mxu0 0
    %1585 = vmatprep.subr.bf16.mxu0 0
    %1586 = vmatpush1.bf16.msra.mxu0 0
    %1587 = vmatprep.subr.bf16.mxu0 0
    %1588 = vmatpush1.bf16.msra.mxu0 0
    %1589 = vmatprep.subr.bf16.mxu0 0
    %1590 = vmatpush1.bf16.msra.mxu0 0
    %1591 = vmatprep.subr.bf16.mxu0 0
    %1592 = vmatpush1.bf16.msra.mxu0 0
    %1593 = vmatprep.subr.bf16.mxu0 0
    %1594 = vmatpush1.bf16.msra.mxu0 0
    %1595 = vmatprep.subr.bf16.mxu0 0
    %1596 = vmatpush1.bf16.msra.mxu0 %v703
    %1597 = vmatprep.subr.bf16.mxu0 0
    %1598 = vmatpush1.bf16.msra.mxu0 %v702
    %1599 = vmatprep.subr.bf16.mxu0 0
    %1600 = vmatpush2.bf16.msra.mxu0 0
    %1601 = vmatprep.subr.bf16.mxu0 0
    %1602 = vmatpush2.bf16.msra.mxu0 0
    %1603 = vmatprep.subr.bf16.mxu0 0
    %1604 = vmatpush2.bf16.msra.mxu0 0
    %1605 = vmatprep.subr.bf16.mxu0 0
    %1606 = vmatpush2.bf16.msra.mxu0 0
    %1607 = vmatprep.subr.bf16.mxu0 0
    %1608 = vmatpush2.bf16.msra.mxu0 0
    %1609 = vmatprep.subr.bf16.mxu0 0
    %1610 = vmatpush2.bf16.msra.mxu0 0
    %1611 = vmatprep.subr.bf16.mxu0 0
    %1612 = vmatpush2.bf16.msra.mxu0 0
    %1613 = vmatprep.subr.bf16.mxu0 0
    %1614 = vmatpush2.bf16.msra.mxu0 0
    %1615 = vmatprep.mubr.bf16.mxu0 0
    %1616 = vmatmul.mubr.bf16.gmra.mxu0 %v1487
    %v1617 = vpop.f32.mrf.mxu0
    %v1618 = vadd.f32 %v559, %v1617
    %v1619 = vpop.f32.mrf.mxu0
    %v1620 = vpop.f32.mrf.mxu0
    %v1621 = vpop.f32.mrf.mxu0
    %1622 = vdwg.mxu0
    %v1623 = vmul.f32 %v1535, %v1618
    %v1624 = vadd.f32 %v554, %v1623
    %v1625 = vtanh.pop %v1624
    %v1626 = vsub.f32 1.0, %v1582
    %v1627 = vmul.f32 %v1626, %v1625
    %v1628 = vmul.f32 %v1582, %v1483
    %v1629 = vadd.f32 %v1627, %v1628
    %1630 = vst.msk [vmem:[#allocation2 + $0x6] sm:$0x1] %vm753, %v1629
    %v1631 = vpack.c.bf16 %v1629, %v1629
    %v1633 = vsel %vm207, %v1631, 0
    %1635 = vmatprep.subr.bf16.mxu0 0
    %1636 = vmatpush1.bf16.msra.mxu0 0
    %1637 = vmatprep.subr.bf16.mxu0 0
    %1638 = vmatpush1.bf16.msra.mxu0 0
    %1639 = vmatprep.subr.bf16.mxu0 0
    %1640 = vmatpush1.bf16.msra.mxu0 0
    %1641 = vmatprep.subr.bf16.mxu0 0
    %1642 = vmatpush1.bf16.msra.mxu0 0
    %1643 = vmatprep.subr.bf16.mxu0 0
    %1644 = vmatpush1.bf16.msra.mxu0 0
    %1645 = vmatprep.subr.bf16.mxu0 0
    %1646 = vmatpush1.bf16.msra.mxu0 0
    %1647 = vmatprep.subr.bf16.mxu0 0
    %1648 = vmatpush1.bf16.msra.mxu0 %v582
    %1649 = vmatprep.subr.bf16.mxu0 0
    %1650 = vmatpush1.bf16.msra.mxu0 %v581
    %1651 = vmatprep.subr.bf16.mxu0 0
    %1652 = vmatpush2.bf16.msra.mxu0 0
    %1653 = vmatprep.subr.bf16.mxu0 0
    %1654 = vmatpush2.bf16.msra.mxu0 0
    %1655 = vmatprep.subr.bf16.mxu0 0
    %1656 = vmatpush2.bf16.msra.mxu0 0
    %1657 = vmatprep.subr.bf16.mxu0 0
    %1658 = vmatpush2.bf16.msra.mxu0 0
    %1659 = vmatprep.subr.bf16.mxu0 0
    %1660 = vmatpush2.bf16.msra.mxu0 0
    %1661 = vmatprep.subr.bf16.mxu0 0
    %1662 = vmatpush2.bf16.msra.mxu0 0
    %1663 = vmatprep.subr.bf16.mxu0 0
    %1664 = vmatpush2.bf16.msra.mxu0 0
    %1665 = vmatprep.subr.bf16.mxu0 0
    %1666 = vmatpush2.bf16.msra.mxu0 0
    %1667 = vmatprep.mubr.bf16.mxu0 0
    %1668 = vmatmul.mubr.bf16.gmra.mxu0 %v1633
    %v1669 = vpop.f32.mrf.mxu0
    %v1670 = vadd.f32 0.0, %v1669
    %v1671 = vpop.f32.mrf.mxu0
    %v1672 = vpop.f32.mrf.mxu0
    %v1673 = vpop.f32.mrf.mxu0
    %1674 = vdwg.mxu0
    %v1675 = vadd.f32 %v440, %v1670
    %v1676 = vxor.u32 %v1675, 2147483648
    %v1677 = vmul.f32 %v1676, 1.442695
    %v1678 = vpow.pop %v1677
    %v1679 = vadd.f32 %v1678, 1.0
    %v1680 = vrcp.pop %v1679
    %v1681 = vmul.f32 1.0, %v1680
    %1682 = vmatprep.subr.bf16.mxu0 0
    %1683 = vmatpush1.bf16.msra.mxu0 0
    %1684 = vmatprep.subr.bf16.mxu0 0
    %1685 = vmatpush1.bf16.msra.mxu0 0
    %1686 = vmatprep.subr.bf16.mxu0 0
    %1687 = vmatpush1.bf16.msra.mxu0 0
    %1688 = vmatprep.subr.bf16.mxu0 0
    %1689 = vmatpush1.bf16.msra.mxu0 0
    %1690 = vmatprep.subr.bf16.mxu0 0
    %1691 = vmatpush1.bf16.msra.mxu0 0
    %1692 = vmatprep.subr.bf16.mxu0 0
    %1693 = vmatpush1.bf16.msra.mxu0 0
    %1694 = vmatprep.subr.bf16.mxu0 0
    %1695 = vmatpush1.bf16.msra.mxu0 %v644
    %1696 = vmatprep.subr.bf16.mxu0 0
    %1697 = vmatpush1.bf16.msra.mxu0 %v643
    %1698 = vmatprep.subr.bf16.mxu0 0
    %1699 = vmatpush2.bf16.msra.mxu0 0
    %1700 = vmatprep.subr.bf16.mxu0 0
    %1701 = vmatpush2.bf16.msra.mxu0 0
    %1702 = vmatprep.subr.bf16.mxu0 0
    %1703 = vmatpush2.bf16.msra.mxu0 0
    %1704 = vmatprep.subr.bf16.mxu0 0
    %1705 = vmatpush2.bf16.msra.mxu0 0
    %1706 = vmatprep.subr.bf16.mxu0 0
    %1707 = vmatpush2.bf16.msra.mxu0 0
    %1708 = vmatprep.subr.bf16.mxu0 0
    %1709 = vmatpush2.bf16.msra.mxu0 0
    %1710 = vmatprep.subr.bf16.mxu0 0
    %1711 = vmatpush2.bf16.msra.mxu0 0
    %1712 = vmatprep.subr.bf16.mxu0 0
    %1713 = vmatpush2.bf16.msra.mxu0 0
    %1714 = vmatprep.mubr.bf16.mxu0 0
    %1715 = vmatmul.mubr.bf16.gmra.mxu0 %v1633
    %v1716 = vpop.f32.mrf.mxu0
    %v1717 = vadd.f32 0.0, %v1716
    %v1718 = vpop.f32.mrf.mxu0
    %v1719 = vpop.f32.mrf.mxu0
    %v1720 = vpop.f32.mrf.mxu0
    %1721 = vdwg.mxu0
    %v1722 = vadd.f32 %v497, %v1717
    %v1723 = vxor.u32 %v1722, 2147483648
    %v1724 = vmul.f32 %v1723, 1.442695
    %v1725 = vpow.pop %v1724
    %v1726 = vadd.f32 %v1725, 1.0
    %v1727 = vrcp.pop %v1726
    %v1728 = vmul.f32 1.0, %v1727
    %1729 = vmatprep.subr.bf16.mxu0 0
    %1730 = vmatpush1.bf16.msra.mxu0 0
    %1731 = vmatprep.subr.bf16.mxu0 0
    %1732 = vmatpush1.bf16.msra.mxu0 0
    %1733 = vmatprep.subr.bf16.mxu0 0
    %1734 = vmatpush1.bf16.msra.mxu0 0
    %1735 = vmatprep.subr.bf16.mxu0 0
    %1736 = vmatpush1.bf16.msra.mxu0 0
    %1737 = vmatprep.subr.bf16.mxu0 0
    %1738 = vmatpush1.bf16.msra.mxu0 0
    %1739 = vmatprep.subr.bf16.mxu0 0
    %1740 = vmatpush1.bf16.msra.mxu0 0
    %1741 = vmatprep.subr.bf16.mxu0 0
    %1742 = vmatpush1.bf16.msra.mxu0 %v703
    %1743 = vmatprep.subr.bf16.mxu0 0
    %1744 = vmatpush1.bf16.msra.mxu0 %v702
    %1745 = vmatprep.subr.bf16.mxu0 0
    %1746 = vmatpush2.bf16.msra.mxu0 0
    %1747 = vmatprep.subr.bf16.mxu0 0
    %1748 = vmatpush2.bf16.msra.mxu0 0
    %1749 = vmatprep.subr.bf16.mxu0 0
    %1750 = vmatpush2.bf16.msra.mxu0 0
    %1751 = vmatprep.subr.bf16.mxu0 0
    %1752 = vmatpush2.bf16.msra.mxu0 0
    %1753 = vmatprep.subr.bf16.mxu0 0
    %1754 = vmatpush2.bf16.msra.mxu0 0
    %1755 = vmatprep.subr.bf16.mxu0 0
    %1756 = vmatpush2.bf16.msra.mxu0 0
    %1757 = vmatprep.subr.bf16.mxu0 0
    %1758 = vmatpush2.bf16.msra.mxu0 0
    %1759 = vmatprep.subr.bf16.mxu0 0
    %1760 = vmatpush2.bf16.msra.mxu0 0
    %1761 = vmatprep.mubr.bf16.mxu0 0
    %1762 = vmatmul.mubr.bf16.gmra.mxu0 %v1633
    %v1763 = vpop.f32.mrf.mxu0
    %v1764 = vadd.f32 %v559, %v1763
    %v1765 = vpop.f32.mrf.mxu0
    %v1766 = vpop.f32.mrf.mxu0
    %v1767 = vpop.f32.mrf.mxu0
    %1768 = vdwg.mxu0
    %v1769 = vmul.f32 %v1681, %v1764
    %v1770 = vadd.f32 %v554, %v1769
    %v1771 = vtanh.pop %v1770
    %v1772 = vsub.f32 1.0, %v1728
    %v1773 = vmul.f32 %v1772, %v1771
    %v1774 = vmul.f32 %v1728, %v1629
    %v1775 = vadd.f32 %v1773, %v1774
    %1776 = vst.msk [vmem:[#allocation2 + $0x7] sm:$0x1] %vm753, %v1775
    %v1777 = vld [vmem:[#allocation2] sm:$0xff]
    %v1778 = vld [vmem:[%s19] sm:$0xf]
    %v1779 = vld [vmem:[%s19 + $0x4] sm:$0xf]
    %v1780 = vld [vmem:[%s19 + $0x8] sm:$0xf]
    %v1781 = vld [vmem:[%s19 + $0xc] sm:$0xf]
    %v1782 = vpack.c.bf16 %v1777, %v1777
    %v1783 = vld [vmem:[#allocation18] sm:$0x1]
    %v1785 = vlaneseq
    %v1786 = vshrl.u32 %v1785, 7
    %v1787 = vsub.s32 0, %v1786
    %v1788 = vrot.slane %v1783, %v1787
    %v1794 = vunpack.c.l.b16 %v1778
    %v1795 = vunpack.c.l.b16 %v1779
    %v1796 = vunpack.c.l.b16 %v1780
    %v1797 = vunpack.c.l.b16 %v1781
    %v1798 = vpack.c.b16 %v1795, %v1794
    %v1799 = vpack.c.b16 %v1797, %v1796
    %v1803 = vsel %vm207, %v1782, 0
    %1805 = vmatprep.subr.bf16.mxu0 0
    %1806 = vmatpush1.bf16.msra.mxu0 0
    %1807 = vmatprep.subr.bf16.mxu0 0
    %1808 = vmatpush1.bf16.msra.mxu0 0
    %1809 = vmatprep.subr.bf16.mxu0 0
    %1810 = vmatpush1.bf16.msra.mxu0 0
    %1811 = vmatprep.subr.bf16.mxu0 0
    %1812 = vmatpush1.bf16.msra.mxu0 0
    %1813 = vmatprep.subr.bf16.mxu0 0
    %1814 = vmatpush1.bf16.msra.mxu0 0
    %1815 = vmatprep.subr.bf16.mxu0 0
    %1816 = vmatpush1.bf16.msra.mxu0 0
    %1817 = vmatprep.subr.bf16.mxu0 0
    %1818 = vmatpush1.bf16.msra.mxu0 %v1799
    %1819 = vmatprep.subr.bf16.mxu0 0
    %1820 = vmatpush1.bf16.msra.mxu0 %v1798
    %1821 = vmatprep.subr.bf16.mxu0 0
    %1822 = vmatpush2.bf16.msra.mxu0 0
    %1823 = vmatprep.subr.bf16.mxu0 0
    %1824 = vmatpush2.bf16.msra.mxu0 0
    %1825 = vmatprep.subr.bf16.mxu0 0
    %1826 = vmatpush2.bf16.msra.mxu0 0
    %1827 = vmatprep.subr.bf16.mxu0 0
    %1828 = vmatpush2.bf16.msra.mxu0 0
    %1829 = vmatprep.subr.bf16.mxu0 0
    %1830 = vmatpush2.bf16.msra.mxu0 0
    %1831 = vmatprep.subr.bf16.mxu0 0
    %1832 = vmatpush2.bf16.msra.mxu0 0
    %1833 = vmatprep.subr.bf16.mxu0 0
    %1834 = vmatpush2.bf16.msra.mxu0 0
    %1835 = vmatprep.subr.bf16.mxu0 0
    %1836 = vmatpush2.bf16.msra.mxu0 0
    %1837 = vmatprep.mubr.bf16.mxu0 0
    %1838 = vmatmul.mubr.bf16.gmra.mxu0 %v1803
    %v1839 = vpop.f32.mrf.mxu0
    %v1840 = vadd.f32 %v1788, %v1839
    %v1841 = vpop.f32.mrf.mxu0
    %v1842 = vpop.f32.mrf.mxu0
    %v1843 = vpop.f32.mrf.mxu0
    %1844 = vdwg.mxu0
    %1845 = vmax.xlane.f32.xlu0 %v1840
    %v1846 = vpop.xlane.xlu0 %1845
    %v1847 = vsub.f32 %v1840, %v1846
    %v1848 = vmul.f32 %v1847, 1.442695
    %v1849 = vpow.pop %v1848
    %1850 = vadd.xlane.f32.xlu0 %v1849
    %v1851 = vpop.xlane.xlu0 %1850
    %v1852 = vlog2.pop %v1851
    %v1853 = vmul.f32 %v1852, 0.6931472
    %v1854 = vadd.f32 %v1853, %v1846
    %v1855 = vsub.f32 %v1840, %v1854
    %1856 = vst [vmem:[#allocation20] sm:$0xff] %v1855
    // Predicated region
    $region126: #{seq2seq_forward.1} parent=1 // pred_check
      _
    $region127: #{seq2seq_forward.1} parent=1 // pred_check_branch
      %1858 = sbr.rel (0) target = $region129
    $region128: #{seq2seq_forward.1} parent=1 // pred_region
      %s1860 = ssub.s32 128, 128
      %1861 = vsyncadd [#allocation5], %s1860
      %s1863 = sshll.u32 [#allocation20], 4
      %s1864 = int_to_ptr.vmem [resolvable:$true] %s1863
      %1866 = dma.vmem_to_hbm [thread:$0]  %s1864, 128, %s21, [#allocation5]
    $region129: #{seq2seq_forward.1} parent=1 // pred_fallthru
      _
    // Predicated region
    $region130: #{seq2seq_forward.1} parent=1 // pred_check
      _
    $region131: #{seq2seq_forward.1} parent=1 // pred_check_branch
      %1868 = sbr.rel (0) target = $region133
    $region132: #{seq2seq_forward.1} parent=1 // pred_region
      %1869 = dma.done [#allocation5], 128
    $region133: #{seq2seq_forward.1} parent=1 // pred_fallthru
      _
    %1870 = vsyncpa [#allocation4], 1
    %1871 = vsyncpa [#allocation7], 1
    %1872 = vsyncpa [#allocation10], 1
    %1873 = vsyncpa [#allocation13], 1
    %1874 = vsyncpa [#allocation16], 1
    %1875 = vsyncpa [#allocation19], 1
    %1876 = vsyncpa [#allocation5], 1

</llo_original>
